<compile_context>
chip_gen: v5e
topology: v5e:2x2
jax: 0.10.0
libtpu: 0.0.40
codegen_flags: <defaults>
</compile_context>

<pallas_src>
import jax
import jax.numpy as jnp
from jax.experimental import pallas as pl
from jax.experimental.pallas import tpu as pltpu


def decoder_kernel(x_ref, wih0_ref, whh0_ref, b0_ref,
                   wih1_ref, whh1_ref, b1_ref, wbd_ref, bbd_ref,
                   out_ref):
    """Whole decoder forward for one batch of latents.

    x_ref    : (B, F)        latent inputs (repeated over time logically)
    wih0_ref : (F, 4H)       layer-0 input weights (pre-transposed)
    whh0_ref : (H, 4H)       layer-0 recurrent weights (pre-transposed)
    b0_ref   : (1, 4H)       b_ih_l0 + b_hh_l0
    wih1_ref : (H, 4H)       layer-1 input weights (pre-transposed)
    whh1_ref : (H, 4H)       layer-1 recurrent weights (pre-transposed)
    b1_ref   : (1, 4H)       b_ih_l1 + b_hh_l1
    wbd_ref  : (T*H, T*F)    block-diagonal fc weight (wfc.T on the diagonal)
    bbd_ref  : (1, T*F)      fc bias tiled T times
    out_ref  : (B, T*F)      lane-dense flattened output
    """
    H = whh0_ref.shape[0]
    B = x_ref.shape[0]
    T = wbd_ref.shape[0] // H

    # Hoist all loop-invariant loads out of the recurrence.
    whh0 = whh0_ref[...]
    wih1 = wih1_ref[...]
    whh1 = whh1_ref[...]
    b1 = b1_ref[...]

    # The same latent is fed at every timestep, so the layer-0 input
    # projection is loop-invariant; compute it once on the MXU.
    xin0 = jnp.dot(x_ref[...], wih0_ref[...],
                   preferred_element_type=jnp.float32) + b0_ref[...]

    zeros = jnp.zeros((B, H), jnp.float32)
    h0, c0, h1, c1 = zeros, zeros, zeros, zeros

    def lstm_cell(gates, c):
        # Two full-vreg EUP ops, then static H-wide gate extracts.
        # PyTorch gate order along 4H: i, f, g, o.
        sig = jax.nn.sigmoid(gates)
        th = jnp.tanh(gates)
        i = sig[:, 0 * H:1 * H]
        f = sig[:, 1 * H:2 * H]
        g = th[:, 2 * H:3 * H]
        o = sig[:, 3 * H:4 * H]
        c_new = f * c + i * g
        h_new = o * jnp.tanh(c_new)
        return h_new, c_new

    # Layer-1 recurrent projection for step 0: h1 == 0, so it is just the bias.
    p1 = jnp.broadcast_to(b1, (B, 4 * H))

    h1_list = []
    for t in range(T):  # T is static -> fully unrolled recurrence
        # layer 0 (on the critical chain)
        gates0 = xin0 + jnp.dot(h0, whh0, preferred_element_type=jnp.float32)
        h0, c0 = lstm_cell(gates0, c0)
        # layer 1: only the h0-dependent half sits on the chain; p1 was
        # produced from h1_{t-1} and overlaps layer-0 of this step.
        gates1 = jnp.dot(h0, wih1, preferred_element_type=jnp.float32) + p1
        h1, c1 = lstm_cell(gates1, c1)
        h1_list.append(h1)
        if t + 1 < T:
            # Off-chain recurrent projection for the next step.
            p1 = jnp.dot(h1, whh1, preferred_element_type=jnp.float32) + b1

    # Single post-loop FC head: one (B, T*H) x (T*H, T*F) matmul, then a
    # single lane-dense (B, T*F) = (4, 128) unmasked store.
    hcat = jnp.concatenate(h1_list, axis=1)                      # (B, T*H)
    out = jnp.dot(hcat, wbd_ref[...],
                  preferred_element_type=jnp.float32) + bbd_ref[...]
    out_ref[...] = out.astype(out_ref.dtype)


def decoder_forward(x, params, timesteps):
    """x: (B, features) latent. Returns (B, timesteps, features)."""
    B, F = x.shape
    H = params["w_hh_l0"].shape[1]
    T = timesteps

    # Pre-transpose weights to MXU-friendly (in, out) layout and fold the two
    # LSTM bias vectors together.
    wih0 = params["w_ih_l0"].T                                   # (F, 4H)
    whh0 = params["w_hh_l0"].T                                   # (H, 4H)
    b0 = (params["b_ih_l0"] + params["b_hh_l0"]).reshape(1, 4 * H)
    wih1 = params["w_ih_l1"].T                                   # (H, 4H)
    whh1 = params["w_hh_l1"].T                                   # (H, 4H)
    b1 = (params["b_ih_l1"] + params["b_hh_l1"]).reshape(1, 4 * H)

    # Block-diagonal FC head: (T*H, T*F) with fc_w.T repeated on the diagonal,
    # plus the bias tiled once.  Lets the kernel apply the head to all T
    # timesteps in a single matmul after the recurrence.
    wfc_t = params["fc_w"].T                                     # (H, F)
    wbd = jnp.kron(jnp.eye(T, dtype=wfc_t.dtype), wfc_t)         # (T*H, T*F)
    bbd = jnp.tile(params["fc_b"].reshape(1, F), (1, T))         # (1, T*F)

    vmem_spec = pl.BlockSpec(memory_space=pltpu.MemorySpace.VMEM)

    out_flat = pl.pallas_call(
        decoder_kernel,
        out_shape=jax.ShapeDtypeStruct((B, T * F), x.dtype),
        in_specs=[vmem_spec] * 9,
        out_specs=vmem_spec,
    )(x, wih0, whh0, b0, wih1, whh1, b1, wbd, bbd)

    # (B, T*F) -> (B, T, F) is a free row-major reshape (no transpose).
    return out_flat.reshape(B, T, F)


def decoder_reference(x, params, timesteps):
    """Pure-JAX reference matching PyTorch nn.LSTM(num_layers=2) + Linear."""
    B, F = x.shape
    H = params["w_hh_l0"].shape[1]

    def cell(x_t, h, c, wih, whh, bih, bhh):
        g = x_t @ wih.T + bih + h @ whh.T + bhh
        i, f, gg, o = jnp.split(g, 4, axis=1)
        c = jax.nn.sigmoid(f) * c + jax.nn.sigmoid(i) * jnp.tanh(gg)
        h = jax.nn.sigmoid(o) * jnp.tanh(c)
        return h, c

    h0 = c0 = h1 = c1 = jnp.zeros((B, H), jnp.float32)
    outs = []
    for _ in range(timesteps):
        h0, c0 = cell(x, h0, c0, params["w_ih_l0"], params["w_hh_l0"],
                      params["b_ih_l0"], params["b_hh_l0"])
        h1, c1 = cell(h0, h1, c1, params["w_ih_l1"], params["w_hh_l1"],
                      params["b_ih_l1"], params["b_hh_l1"])
        outs.append(h1 @ params["fc_w"].T + params["fc_b"])
    return jnp.stack(outs, axis=1)  # (B, T, F)


def init_params(key, features, latent_dim):
    """Deterministic synthetic init with PyTorch-like shapes."""
    H, F = latent_dim, features
    ks = jax.random.split(key, 10)
    s = 1.0 / jnp.sqrt(H)
    u = lambda k, shp: jax.random.uniform(k, shp, jnp.float32, -s, s)
    return {
        "w_ih_l0": u(ks[0], (4 * H, F)),
        "w_hh_l0": u(ks[1], (4 * H, H)),
        "b_ih_l0": u(ks[2], (4 * H,)),
        "b_hh_l0": u(ks[3], (4 * H,)),
        "w_ih_l1": u(ks[4], (4 * H, H)),
        "w_hh_l1": u(ks[5], (4 * H, H)),
        "b_ih_l1": u(ks[6], (4 * H,)),
        "b_hh_l1": u(ks[7], (4 * H,)),
        "fc_w": u(ks[8], (F, H)),
        "fc_b": u(ks[9], (F,)),
    }


if __name__ == "__main__":
    # Small config: features=16, latent_dim=32, timesteps=8, batch=4
    B, FEATURES, LATENT, T = 4, 16, 32, 8

    key = jax.random.PRNGKey(0)
    kx, kp = jax.random.split(key)
    x = jax.random.normal(kx, (B, FEATURES), jnp.float32)
    params = init_params(kp, FEATURES, LATENT)

    out = decoder_forward(x, params, T)
    out = jax.block_until_ready(out)

    ref = decoder_reference(x, params, T)
    assert out.shape == (B, T, FEATURES), out.shape
    assert jnp.allclose(out, ref, atol=1e-5, rtol=1e-5), (
        float(jnp.max(jnp.abs(out - ref))))

    print("KERNEL_OK")
</pallas_src>

<mosaic_0001>
module attributes {stable_mosaic.version = 11 : i64} {
  func.func @decoder_kernel(%arg0: memref<4x16xf32, #tpu.memory_space<vmem>>, %arg1: memref<16x128xf32, #tpu.memory_space<vmem>>, %arg2: memref<32x128xf32, #tpu.memory_space<vmem>>, %arg3: memref<1x128xf32, #tpu.memory_space<vmem>>, %arg4: memref<32x128xf32, #tpu.memory_space<vmem>>, %arg5: memref<32x128xf32, #tpu.memory_space<vmem>>, %arg6: memref<1x128xf32, #tpu.memory_space<vmem>>, %arg7: memref<256x128xf32, #tpu.memory_space<vmem>>, %arg8: memref<1x128xf32, #tpu.memory_space<vmem>>, %arg9: memref<4x128xf32, #tpu.memory_space<vmem>>) attributes {dimension_semantics = [], scalar_prefetch = 0 : i64, scratch_operands = 0 : i64, tpu.core_type = #tpu.core_type<tc>} {
    %c0 = arith.constant 0 : index
    %c0_0 = arith.constant 0 : index
    %0 = vector.load %arg2[%c0, %c0_0] : memref<32x128xf32, #tpu.memory_space<vmem>>, vector<32x128xf32>
    %c0_1 = arith.constant 0 : index
    %c0_2 = arith.constant 0 : index
    %1 = vector.load %arg4[%c0_1, %c0_2] : memref<32x128xf32, #tpu.memory_space<vmem>>, vector<32x128xf32>
    %c0_3 = arith.constant 0 : index
    %c0_4 = arith.constant 0 : index
    %2 = vector.load %arg5[%c0_3, %c0_4] : memref<32x128xf32, #tpu.memory_space<vmem>>, vector<32x128xf32>
    %c0_5 = arith.constant 0 : index
    %c0_6 = arith.constant 0 : index
    %3 = vector.load %arg6[%c0_5, %c0_6] : memref<1x128xf32, #tpu.memory_space<vmem>>, vector<1x128xf32>
    %c0_7 = arith.constant 0 : index
    %c0_8 = arith.constant 0 : index
    %4 = vector.load %arg0[%c0_7, %c0_8] : memref<4x16xf32, #tpu.memory_space<vmem>>, vector<4x16xf32>
    %c0_9 = arith.constant 0 : index
    %c0_10 = arith.constant 0 : index
    %5 = vector.load %arg1[%c0_9, %c0_10] : memref<16x128xf32, #tpu.memory_space<vmem>>, vector<16x128xf32>
    %cst = arith.constant dense<0.000000e+00> : vector<4x128xf32>
    %6 = tpu.matmul %4, %5, %cst {dimension_numbers = #tpu.dot_dimension_numbers<[1], [0], [0], [1], [0, 0, 1, 1], [], []>} : vector<4x16xf32>, vector<16x128xf32>, vector<4x128xf32> -> vector<4x128xf32>
    %c0_11 = arith.constant 0 : index
    %c0_12 = arith.constant 0 : index
    %7 = vector.load %arg3[%c0_11, %c0_12] : memref<1x128xf32, #tpu.memory_space<vmem>>, vector<1x128xf32>
    %8 = vector.broadcast %7 : vector<1x128xf32> to vector<4x128xf32>
    %9 = arith.addf %6, %8 : vector<4x128xf32>
    %cst_13 = arith.constant 0.000000e+00 : f32
    %10 = vector.broadcast %cst_13 : f32 to vector<4x32xf32>
    %11 = vector.shape_cast %3 : vector<1x128xf32> to vector<1x128xf32>
    %12 = vector.broadcast %11 : vector<1x128xf32> to vector<4x128xf32>
    %cst_14 = arith.constant dense<0.000000e+00> : vector<4x128xf32>
    %13 = tpu.matmul %10, %0, %cst_14 {dimension_numbers = #tpu.dot_dimension_numbers<[1], [0], [0], [1], [0, 0, 1, 1], [], []>} : vector<4x32xf32>, vector<32x128xf32>, vector<4x128xf32> -> vector<4x128xf32>
    %14 = arith.addf %9, %13 : vector<4x128xf32>
    %15 = arith.negf %14 : vector<4x128xf32>
    %16 = math.exp %15 : vector<4x128xf32>
    %cst_15 = arith.constant 1.000000e+00 : f32
    %17 = vector.broadcast %cst_15 : f32 to vector<4x128xf32>
    %18 = arith.addf %17, %16 : vector<4x128xf32>
    %19 = arith.divf %17, %18 : vector<4x128xf32>
    %20 = math.tanh %14 : vector<4x128xf32>
    %21 = vector.extract_strided_slice %19 {offsets = [0, 0], sizes = [4, 32], strides = [1, 1]} : vector<4x128xf32> to vector<4x32xf32>
    %22 = vector.extract_strided_slice %19 {offsets = [0, 32], sizes = [4, 32], strides = [1, 1]} : vector<4x128xf32> to vector<4x32xf32>
    %23 = vector.extract_strided_slice %20 {offsets = [0, 64], sizes = [4, 32], strides = [1, 1]} : vector<4x128xf32> to vector<4x32xf32>
    %24 = vector.extract_strided_slice %19 {offsets = [0, 96], sizes = [4, 32], strides = [1, 1]} : vector<4x128xf32> to vector<4x32xf32>
    %25 = arith.mulf %22, %10 : vector<4x32xf32>
    %26 = arith.mulf %21, %23 : vector<4x32xf32>
    %27 = arith.addf %25, %26 : vector<4x32xf32>
    %28 = math.tanh %27 : vector<4x32xf32>
    %29 = arith.mulf %24, %28 : vector<4x32xf32>
    %cst_16 = arith.constant dense<0.000000e+00> : vector<4x128xf32>
    %30 = tpu.matmul %29, %1, %cst_16 {dimension_numbers = #tpu.dot_dimension_numbers<[1], [0], [0], [1], [0, 0, 1, 1], [], []>} : vector<4x32xf32>, vector<32x128xf32>, vector<4x128xf32> -> vector<4x128xf32>
    %31 = arith.addf %30, %12 : vector<4x128xf32>
    %32 = arith.negf %31 : vector<4x128xf32>
    %33 = math.exp %32 : vector<4x128xf32>
    %cst_17 = arith.constant 1.000000e+00 : f32
    %34 = vector.broadcast %cst_17 : f32 to vector<4x128xf32>
    %35 = arith.addf %34, %33 : vector<4x128xf32>
    %36 = arith.divf %34, %35 : vector<4x128xf32>
    %37 = math.tanh %31 : vector<4x128xf32>
    %38 = vector.extract_strided_slice %36 {offsets = [0, 0], sizes = [4, 32], strides = [1, 1]} : vector<4x128xf32> to vector<4x32xf32>
    %39 = vector.extract_strided_slice %36 {offsets = [0, 32], sizes = [4, 32], strides = [1, 1]} : vector<4x128xf32> to vector<4x32xf32>
    %40 = vector.extract_strided_slice %37 {offsets = [0, 64], sizes = [4, 32], strides = [1, 1]} : vector<4x128xf32> to vector<4x32xf32>
    %41 = vector.extract_strided_slice %36 {offsets = [0, 96], sizes = [4, 32], strides = [1, 1]} : vector<4x128xf32> to vector<4x32xf32>
    %42 = arith.mulf %39, %10 : vector<4x32xf32>
    %43 = arith.mulf %38, %40 : vector<4x32xf32>
    %44 = arith.addf %42, %43 : vector<4x32xf32>
    %45 = math.tanh %44 : vector<4x32xf32>
    %46 = arith.mulf %41, %45 : vector<4x32xf32>
    %cst_18 = arith.constant dense<0.000000e+00> : vector<4x128xf32>
    %47 = tpu.matmul %46, %2, %cst_18 {dimension_numbers = #tpu.dot_dimension_numbers<[1], [0], [0], [1], [0, 0, 1, 1], [], []>} : vector<4x32xf32>, vector<32x128xf32>, vector<4x128xf32> -> vector<4x128xf32>
    %48 = vector.broadcast %3 : vector<1x128xf32> to vector<4x128xf32>
    %49 = arith.addf %47, %48 : vector<4x128xf32>
    %cst_19 = arith.constant dense<0.000000e+00> : vector<4x128xf32>
    %50 = tpu.matmul %29, %0, %cst_19 {dimension_numbers = #tpu.dot_dimension_numbers<[1], [0], [0], [1], [0, 0, 1, 1], [], []>} : vector<4x32xf32>, vector<32x128xf32>, vector<4x128xf32> -> vector<4x128xf32>
    %51 = arith.addf %9, %50 : vector<4x128xf32>
    %52 = arith.negf %51 : vector<4x128xf32>
    %53 = math.exp %52 : vector<4x128xf32>
    %cst_20 = arith.constant 1.000000e+00 : f32
    %54 = vector.broadcast %cst_20 : f32 to vector<4x128xf32>
    %55 = arith.addf %54, %53 : vector<4x128xf32>
    %56 = arith.divf %54, %55 : vector<4x128xf32>
    %57 = math.tanh %51 : vector<4x128xf32>
    %58 = vector.extract_strided_slice %56 {offsets = [0, 0], sizes = [4, 32], strides = [1, 1]} : vector<4x128xf32> to vector<4x32xf32>
    %59 = vector.extract_strided_slice %56 {offsets = [0, 32], sizes = [4, 32], strides = [1, 1]} : vector<4x128xf32> to vector<4x32xf32>
    %60 = vector.extract_strided_slice %57 {offsets = [0, 64], sizes = [4, 32], strides = [1, 1]} : vector<4x128xf32> to vector<4x32xf32>
    %61 = vector.extract_strided_slice %56 {offsets = [0, 96], sizes = [4, 32], strides = [1, 1]} : vector<4x128xf32> to vector<4x32xf32>
    %62 = arith.mulf %59, %27 : vector<4x32xf32>
    %63 = arith.mulf %58, %60 : vector<4x32xf32>
    %64 = arith.addf %62, %63 : vector<4x32xf32>
    %65 = math.tanh %64 : vector<4x32xf32>
    %66 = arith.mulf %61, %65 : vector<4x32xf32>
    %cst_21 = arith.constant dense<0.000000e+00> : vector<4x128xf32>
    %67 = tpu.matmul %66, %1, %cst_21 {dimension_numbers = #tpu.dot_dimension_numbers<[1], [0], [0], [1], [0, 0, 1, 1], [], []>} : vector<4x32xf32>, vector<32x128xf32>, vector<4x128xf32> -> vector<4x128xf32>
    %68 = arith.addf %67, %49 : vector<4x128xf32>
    %69 = arith.negf %68 : vector<4x128xf32>
    %70 = math.exp %69 : vector<4x128xf32>
    %cst_22 = arith.constant 1.000000e+00 : f32
    %71 = vector.broadcast %cst_22 : f32 to vector<4x128xf32>
    %72 = arith.addf %71, %70 : vector<4x128xf32>
    %73 = arith.divf %71, %72 : vector<4x128xf32>
    %74 = math.tanh %68 : vector<4x128xf32>
    %75 = vector.extract_strided_slice %73 {offsets = [0, 0], sizes = [4, 32], strides = [1, 1]} : vector<4x128xf32> to vector<4x32xf32>
    %76 = vector.extract_strided_slice %73 {offsets = [0, 32], sizes = [4, 32], strides = [1, 1]} : vector<4x128xf32> to vector<4x32xf32>
    %77 = vector.extract_strided_slice %74 {offsets = [0, 64], sizes = [4, 32], strides = [1, 1]} : vector<4x128xf32> to vector<4x32xf32>
    %78 = vector.extract_strided_slice %73 {offsets = [0, 96], sizes = [4, 32], strides = [1, 1]} : vector<4x128xf32> to vector<4x32xf32>
    %79 = arith.mulf %76, %44 : vector<4x32xf32>
    %80 = arith.mulf %75, %77 : vector<4x32xf32>
    %81 = arith.addf %79, %80 : vector<4x32xf32>
    %82 = math.tanh %81 : vector<4x32xf32>
    %83 = arith.mulf %78, %82 : vector<4x32xf32>
    %cst_23 = arith.constant dense<0.000000e+00> : vector<4x128xf32>
    %84 = tpu.matmul %83, %2, %cst_23 {dimension_numbers = #tpu.dot_dimension_numbers<[1], [0], [0], [1], [0, 0, 1, 1], [], []>} : vector<4x32xf32>, vector<32x128xf32>, vector<4x128xf32> -> vector<4x128xf32>
    %85 = vector.broadcast %3 : vector<1x128xf32> to vector<4x128xf32>
    %86 = arith.addf %84, %85 : vector<4x128xf32>
    %cst_24 = arith.constant dense<0.000000e+00> : vector<4x128xf32>
    %87 = tpu.matmul %66, %0, %cst_24 {dimension_numbers = #tpu.dot_dimension_numbers<[1], [0], [0], [1], [0, 0, 1, 1], [], []>} : vector<4x32xf32>, vector<32x128xf32>, vector<4x128xf32> -> vector<4x128xf32>
    %88 = arith.addf %9, %87 : vector<4x128xf32>
    %89 = arith.negf %88 : vector<4x128xf32>
    %90 = math.exp %89 : vector<4x128xf32>
    %cst_25 = arith.constant 1.000000e+00 : f32
    %91 = vector.broadcast %cst_25 : f32 to vector<4x128xf32>
    %92 = arith.addf %91, %90 : vector<4x128xf32>
    %93 = arith.divf %91, %92 : vector<4x128xf32>
    %94 = math.tanh %88 : vector<4x128xf32>
    %95 = vector.extract_strided_slice %93 {offsets = [0, 0], sizes = [4, 32], strides = [1, 1]} : vector<4x128xf32> to vector<4x32xf32>
    %96 = vector.extract_strided_slice %93 {offsets = [0, 32], sizes = [4, 32], strides = [1, 1]} : vector<4x128xf32> to vector<4x32xf32>
    %97 = vector.extract_strided_slice %94 {offsets = [0, 64], sizes = [4, 32], strides = [1, 1]} : vector<4x128xf32> to vector<4x32xf32>
    %98 = vector.extract_strided_slice %93 {offsets = [0, 96], sizes = [4, 32], strides = [1, 1]} : vector<4x128xf32> to vector<4x32xf32>
    %99 = arith.mulf %96, %64 : vector<4x32xf32>
    %100 = arith.mulf %95, %97 : vector<4x32xf32>
    %101 = arith.addf %99, %100 : vector<4x32xf32>
    %102 = math.tanh %101 : vector<4x32xf32>
    %103 = arith.mulf %98, %102 : vector<4x32xf32>
    %cst_26 = arith.constant dense<0.000000e+00> : vector<4x128xf32>
    %104 = tpu.matmul %103, %1, %cst_26 {dimension_numbers = #tpu.dot_dimension_numbers<[1], [0], [0], [1], [0, 0, 1, 1], [], []>} : vector<4x32xf32>, vector<32x128xf32>, vector<4x128xf32> -> vector<4x128xf32>
    %105 = arith.addf %104, %86 : vector<4x128xf32>
    %106 = arith.negf %105 : vector<4x128xf32>
    %107 = math.exp %106 : vector<4x128xf32>
    %cst_27 = arith.constant 1.000000e+00 : f32
    %108 = vector.broadcast %cst_27 : f32 to vector<4x128xf32>
    %109 = arith.addf %108, %107 : vector<4x128xf32>
    %110 = arith.divf %108, %109 : vector<4x128xf32>
    %111 = math.tanh %105 : vector<4x128xf32>
    %112 = vector.extract_strided_slice %110 {offsets = [0, 0], sizes = [4, 32], strides = [1, 1]} : vector<4x128xf32> to vector<4x32xf32>
    %113 = vector.extract_strided_slice %110 {offsets = [0, 32], sizes = [4, 32], strides = [1, 1]} : vector<4x128xf32> to vector<4x32xf32>
    %114 = vector.extract_strided_slice %111 {offsets = [0, 64], sizes = [4, 32], strides = [1, 1]} : vector<4x128xf32> to vector<4x32xf32>
    %115 = vector.extract_strided_slice %110 {offsets = [0, 96], sizes = [4, 32], strides = [1, 1]} : vector<4x128xf32> to vector<4x32xf32>
    %116 = arith.mulf %113, %81 : vector<4x32xf32>
    %117 = arith.mulf %112, %114 : vector<4x32xf32>
    %118 = arith.addf %116, %117 : vector<4x32xf32>
    %119 = math.tanh %118 : vector<4x32xf32>
    %120 = arith.mulf %115, %119 : vector<4x32xf32>
    %cst_28 = arith.constant dense<0.000000e+00> : vector<4x128xf32>
    %121 = tpu.matmul %120, %2, %cst_28 {dimension_numbers = #tpu.dot_dimension_numbers<[1], [0], [0], [1], [0, 0, 1, 1], [], []>} : vector<4x32xf32>, vector<32x128xf32>, vector<4x128xf32> -> vector<4x128xf32>
    %122 = vector.broadcast %3 : vector<1x128xf32> to vector<4x128xf32>
    %123 = arith.addf %121, %122 : vector<4x128xf32>
    %cst_29 = arith.constant dense<0.000000e+00> : vector<4x128xf32>
    %124 = tpu.matmul %103, %0, %cst_29 {dimension_numbers = #tpu.dot_dimension_numbers<[1], [0], [0], [1], [0, 0, 1, 1], [], []>} : vector<4x32xf32>, vector<32x128xf32>, vector<4x128xf32> -> vector<4x128xf32>
    %125 = arith.addf %9, %124 : vector<4x128xf32>
    %126 = arith.negf %125 : vector<4x128xf32>
    %127 = math.exp %126 : vector<4x128xf32>
    %cst_30 = arith.constant 1.000000e+00 : f32
    %128 = vector.broadcast %cst_30 : f32 to vector<4x128xf32>
    %129 = arith.addf %128, %127 : vector<4x128xf32>
    %130 = arith.divf %128, %129 : vector<4x128xf32>
    %131 = math.tanh %125 : vector<4x128xf32>
    %132 = vector.extract_strided_slice %130 {offsets = [0, 0], sizes = [4, 32], strides = [1, 1]} : vector<4x128xf32> to vector<4x32xf32>
    %133 = vector.extract_strided_slice %130 {offsets = [0, 32], sizes = [4, 32], strides = [1, 1]} : vector<4x128xf32> to vector<4x32xf32>
    %134 = vector.extract_strided_slice %131 {offsets = [0, 64], sizes = [4, 32], strides = [1, 1]} : vector<4x128xf32> to vector<4x32xf32>
    %135 = vector.extract_strided_slice %130 {offsets = [0, 96], sizes = [4, 32], strides = [1, 1]} : vector<4x128xf32> to vector<4x32xf32>
    %136 = arith.mulf %133, %101 : vector<4x32xf32>
    %137 = arith.mulf %132, %134 : vector<4x32xf32>
    %138 = arith.addf %136, %137 : vector<4x32xf32>
    %139 = math.tanh %138 : vector<4x32xf32>
    %140 = arith.mulf %135, %139 : vector<4x32xf32>
    %cst_31 = arith.constant dense<0.000000e+00> : vector<4x128xf32>
    %141 = tpu.matmul %140, %1, %cst_31 {dimension_numbers = #tpu.dot_dimension_numbers<[1], [0], [0], [1], [0, 0, 1, 1], [], []>} : vector<4x32xf32>, vector<32x128xf32>, vector<4x128xf32> -> vector<4x128xf32>
    %142 = arith.addf %141, %123 : vector<4x128xf32>
    %143 = arith.negf %142 : vector<4x128xf32>
    %144 = math.exp %143 : vector<4x128xf32>
    %cst_32 = arith.constant 1.000000e+00 : f32
    %145 = vector.broadcast %cst_32 : f32 to vector<4x128xf32>
    %146 = arith.addf %145, %144 : vector<4x128xf32>
    %147 = arith.divf %145, %146 : vector<4x128xf32>
    %148 = math.tanh %142 : vector<4x128xf32>
    %149 = vector.extract_strided_slice %147 {offsets = [0, 0], sizes = [4, 32], strides = [1, 1]} : vector<4x128xf32> to vector<4x32xf32>
    %150 = vector.extract_strided_slice %147 {offsets = [0, 32], sizes = [4, 32], strides = [1, 1]} : vector<4x128xf32> to vector<4x32xf32>
    %151 = vector.extract_strided_slice %148 {offsets = [0, 64], sizes = [4, 32], strides = [1, 1]} : vector<4x128xf32> to vector<4x32xf32>
    %152 = vector.extract_strided_slice %147 {offsets = [0, 96], sizes = [4, 32], strides = [1, 1]} : vector<4x128xf32> to vector<4x32xf32>
    %153 = arith.mulf %150, %118 : vector<4x32xf32>
    %154 = arith.mulf %149, %151 : vector<4x32xf32>
    %155 = arith.addf %153, %154 : vector<4x32xf32>
    %156 = math.tanh %155 : vector<4x32xf32>
    %157 = arith.mulf %152, %156 : vector<4x32xf32>
    %cst_33 = arith.constant dense<0.000000e+00> : vector<4x128xf32>
    %158 = tpu.matmul %157, %2, %cst_33 {dimension_numbers = #tpu.dot_dimension_numbers<[1], [0], [0], [1], [0, 0, 1, 1], [], []>} : vector<4x32xf32>, vector<32x128xf32>, vector<4x128xf32> -> vector<4x128xf32>
    %159 = vector.broadcast %3 : vector<1x128xf32> to vector<4x128xf32>
    %160 = arith.addf %158, %159 : vector<4x128xf32>
    %cst_34 = arith.constant dense<0.000000e+00> : vector<4x128xf32>
    %161 = tpu.matmul %140, %0, %cst_34 {dimension_numbers = #tpu.dot_dimension_numbers<[1], [0], [0], [1], [0, 0, 1, 1], [], []>} : vector<4x32xf32>, vector<32x128xf32>, vector<4x128xf32> -> vector<4x128xf32>
    %162 = arith.addf %9, %161 : vector<4x128xf32>
    %163 = arith.negf %162 : vector<4x128xf32>
    %164 = math.exp %163 : vector<4x128xf32>
    %cst_35 = arith.constant 1.000000e+00 : f32
    %165 = vector.broadcast %cst_35 : f32 to vector<4x128xf32>
    %166 = arith.addf %165, %164 : vector<4x128xf32>
    %167 = arith.divf %165, %166 : vector<4x128xf32>
    %168 = math.tanh %162 : vector<4x128xf32>
    %169 = vector.extract_strided_slice %167 {offsets = [0, 0], sizes = [4, 32], strides = [1, 1]} : vector<4x128xf32> to vector<4x32xf32>
    %170 = vector.extract_strided_slice %167 {offsets = [0, 32], sizes = [4, 32], strides = [1, 1]} : vector<4x128xf32> to vector<4x32xf32>
    %171 = vector.extract_strided_slice %168 {offsets = [0, 64], sizes = [4, 32], strides = [1, 1]} : vector<4x128xf32> to vector<4x32xf32>
    %172 = vector.extract_strided_slice %167 {offsets = [0, 96], sizes = [4, 32], strides = [1, 1]} : vector<4x128xf32> to vector<4x32xf32>
    %173 = arith.mulf %170, %138 : vector<4x32xf32>
    %174 = arith.mulf %169, %171 : vector<4x32xf32>
    %175 = arith.addf %173, %174 : vector<4x32xf32>
    %176 = math.tanh %175 : vector<4x32xf32>
    %177 = arith.mulf %172, %176 : vector<4x32xf32>
    %cst_36 = arith.constant dense<0.000000e+00> : vector<4x128xf32>
    %178 = tpu.matmul %177, %1, %cst_36 {dimension_numbers = #tpu.dot_dimension_numbers<[1], [0], [0], [1], [0, 0, 1, 1], [], []>} : vector<4x32xf32>, vector<32x128xf32>, vector<4x128xf32> -> vector<4x128xf32>
    %179 = arith.addf %178, %160 : vector<4x128xf32>
    %180 = arith.negf %179 : vector<4x128xf32>
    %181 = math.exp %180 : vector<4x128xf32>
    %cst_37 = arith.constant 1.000000e+00 : f32
    %182 = vector.broadcast %cst_37 : f32 to vector<4x128xf32>
    %183 = arith.addf %182, %181 : vector<4x128xf32>
    %184 = arith.divf %182, %183 : vector<4x128xf32>
    %185 = math.tanh %179 : vector<4x128xf32>
    %186 = vector.extract_strided_slice %184 {offsets = [0, 0], sizes = [4, 32], strides = [1, 1]} : vector<4x128xf32> to vector<4x32xf32>
    %187 = vector.extract_strided_slice %184 {offsets = [0, 32], sizes = [4, 32], strides = [1, 1]} : vector<4x128xf32> to vector<4x32xf32>
    %188 = vector.extract_strided_slice %185 {offsets = [0, 64], sizes = [4, 32], strides = [1, 1]} : vector<4x128xf32> to vector<4x32xf32>
    %189 = vector.extract_strided_slice %184 {offsets = [0, 96], sizes = [4, 32], strides = [1, 1]} : vector<4x128xf32> to vector<4x32xf32>
    %190 = arith.mulf %187, %155 : vector<4x32xf32>
    %191 = arith.mulf %186, %188 : vector<4x32xf32>
    %192 = arith.addf %190, %191 : vector<4x32xf32>
    %193 = math.tanh %192 : vector<4x32xf32>
    %194 = arith.mulf %189, %193 : vector<4x32xf32>
    %cst_38 = arith.constant dense<0.000000e+00> : vector<4x128xf32>
    %195 = tpu.matmul %194, %2, %cst_38 {dimension_numbers = #tpu.dot_dimension_numbers<[1], [0], [0], [1], [0, 0, 1, 1], [], []>} : vector<4x32xf32>, vector<32x128xf32>, vector<4x128xf32> -> vector<4x128xf32>
    %196 = vector.broadcast %3 : vector<1x128xf32> to vector<4x128xf32>
    %197 = arith.addf %195, %196 : vector<4x128xf32>
    %cst_39 = arith.constant dense<0.000000e+00> : vector<4x128xf32>
    %198 = tpu.matmul %177, %0, %cst_39 {dimension_numbers = #tpu.dot_dimension_numbers<[1], [0], [0], [1], [0, 0, 1, 1], [], []>} : vector<4x32xf32>, vector<32x128xf32>, vector<4x128xf32> -> vector<4x128xf32>
    %199 = arith.addf %9, %198 : vector<4x128xf32>
    %200 = arith.negf %199 : vector<4x128xf32>
    %201 = math.exp %200 : vector<4x128xf32>
    %cst_40 = arith.constant 1.000000e+00 : f32
    %202 = vector.broadcast %cst_40 : f32 to vector<4x128xf32>
    %203 = arith.addf %202, %201 : vector<4x128xf32>
    %204 = arith.divf %202, %203 : vector<4x128xf32>
    %205 = math.tanh %199 : vector<4x128xf32>
    %206 = vector.extract_strided_slice %204 {offsets = [0, 0], sizes = [4, 32], strides = [1, 1]} : vector<4x128xf32> to vector<4x32xf32>
    %207 = vector.extract_strided_slice %204 {offsets = [0, 32], sizes = [4, 32], strides = [1, 1]} : vector<4x128xf32> to vector<4x32xf32>
    %208 = vector.extract_strided_slice %205 {offsets = [0, 64], sizes = [4, 32], strides = [1, 1]} : vector<4x128xf32> to vector<4x32xf32>
    %209 = vector.extract_strided_slice %204 {offsets = [0, 96], sizes = [4, 32], strides = [1, 1]} : vector<4x128xf32> to vector<4x32xf32>
    %210 = arith.mulf %207, %175 : vector<4x32xf32>
    %211 = arith.mulf %206, %208 : vector<4x32xf32>
    %212 = arith.addf %210, %211 : vector<4x32xf32>
    %213 = math.tanh %212 : vector<4x32xf32>
    %214 = arith.mulf %209, %213 : vector<4x32xf32>
    %cst_41 = arith.constant dense<0.000000e+00> : vector<4x128xf32>
    %215 = tpu.matmul %214, %1, %cst_41 {dimension_numbers = #tpu.dot_dimension_numbers<[1], [0], [0], [1], [0, 0, 1, 1], [], []>} : vector<4x32xf32>, vector<32x128xf32>, vector<4x128xf32> -> vector<4x128xf32>
    %216 = arith.addf %215, %197 : vector<4x128xf32>
    %217 = arith.negf %216 : vector<4x128xf32>
    %218 = math.exp %217 : vector<4x128xf32>
    %cst_42 = arith.constant 1.000000e+00 : f32
    %219 = vector.broadcast %cst_42 : f32 to vector<4x128xf32>
    %220 = arith.addf %219, %218 : vector<4x128xf32>
    %221 = arith.divf %219, %220 : vector<4x128xf32>
    %222 = math.tanh %216 : vector<4x128xf32>
    %223 = vector.extract_strided_slice %221 {offsets = [0, 0], sizes = [4, 32], strides = [1, 1]} : vector<4x128xf32> to vector<4x32xf32>
    %224 = vector.extract_strided_slice %221 {offsets = [0, 32], sizes = [4, 32], strides = [1, 1]} : vector<4x128xf32> to vector<4x32xf32>
    %225 = vector.extract_strided_slice %222 {offsets = [0, 64], sizes = [4, 32], strides = [1, 1]} : vector<4x128xf32> to vector<4x32xf32>
    %226 = vector.extract_strided_slice %221 {offsets = [0, 96], sizes = [4, 32], strides = [1, 1]} : vector<4x128xf32> to vector<4x32xf32>
    %227 = arith.mulf %224, %192 : vector<4x32xf32>
    %228 = arith.mulf %223, %225 : vector<4x32xf32>
    %229 = arith.addf %227, %228 : vector<4x32xf32>
    %230 = math.tanh %229 : vector<4x32xf32>
    %231 = arith.mulf %226, %230 : vector<4x32xf32>
    %cst_43 = arith.constant dense<0.000000e+00> : vector<4x128xf32>
    %232 = tpu.matmul %231, %2, %cst_43 {dimension_numbers = #tpu.dot_dimension_numbers<[1], [0], [0], [1], [0, 0, 1, 1], [], []>} : vector<4x32xf32>, vector<32x128xf32>, vector<4x128xf32> -> vector<4x128xf32>
    %233 = vector.broadcast %3 : vector<1x128xf32> to vector<4x128xf32>
    %234 = arith.addf %232, %233 : vector<4x128xf32>
    %cst_44 = arith.constant dense<0.000000e+00> : vector<4x128xf32>
    %235 = tpu.matmul %214, %0, %cst_44 {dimension_numbers = #tpu.dot_dimension_numbers<[1], [0], [0], [1], [0, 0, 1, 1], [], []>} : vector<4x32xf32>, vector<32x128xf32>, vector<4x128xf32> -> vector<4x128xf32>
    %236 = arith.addf %9, %235 : vector<4x128xf32>
    %237 = arith.negf %236 : vector<4x128xf32>
    %238 = math.exp %237 : vector<4x128xf32>
    %cst_45 = arith.constant 1.000000e+00 : f32
    %239 = vector.broadcast %cst_45 : f32 to vector<4x128xf32>
    %240 = arith.addf %239, %238 : vector<4x128xf32>
    %241 = arith.divf %239, %240 : vector<4x128xf32>
    %242 = math.tanh %236 : vector<4x128xf32>
    %243 = vector.extract_strided_slice %241 {offsets = [0, 0], sizes = [4, 32], strides = [1, 1]} : vector<4x128xf32> to vector<4x32xf32>
    %244 = vector.extract_strided_slice %241 {offsets = [0, 32], sizes = [4, 32], strides = [1, 1]} : vector<4x128xf32> to vector<4x32xf32>
    %245 = vector.extract_strided_slice %242 {offsets = [0, 64], sizes = [4, 32], strides = [1, 1]} : vector<4x128xf32> to vector<4x32xf32>
    %246 = vector.extract_strided_slice %241 {offsets = [0, 96], sizes = [4, 32], strides = [1, 1]} : vector<4x128xf32> to vector<4x32xf32>
    %247 = arith.mulf %244, %212 : vector<4x32xf32>
    %248 = arith.mulf %243, %245 : vector<4x32xf32>
    %249 = arith.addf %247, %248 : vector<4x32xf32>
    %250 = math.tanh %249 : vector<4x32xf32>
    %251 = arith.mulf %246, %250 : vector<4x32xf32>
    %cst_46 = arith.constant dense<0.000000e+00> : vector<4x128xf32>
    %252 = tpu.matmul %251, %1, %cst_46 {dimension_numbers = #tpu.dot_dimension_numbers<[1], [0], [0], [1], [0, 0, 1, 1], [], []>} : vector<4x32xf32>, vector<32x128xf32>, vector<4x128xf32> -> vector<4x128xf32>
    %253 = arith.addf %252, %234 : vector<4x128xf32>
    %254 = arith.negf %253 : vector<4x128xf32>
    %255 = math.exp %254 : vector<4x128xf32>
    %cst_47 = arith.constant 1.000000e+00 : f32
    %256 = vector.broadcast %cst_47 : f32 to vector<4x128xf32>
    %257 = arith.addf %256, %255 : vector<4x128xf32>
    %258 = arith.divf %256, %257 : vector<4x128xf32>
    %259 = math.tanh %253 : vector<4x128xf32>
    %260 = vector.extract_strided_slice %258 {offsets = [0, 0], sizes = [4, 32], strides = [1, 1]} : vector<4x128xf32> to vector<4x32xf32>
    %261 = vector.extract_strided_slice %258 {offsets = [0, 32], sizes = [4, 32], strides = [1, 1]} : vector<4x128xf32> to vector<4x32xf32>
    %262 = vector.extract_strided_slice %259 {offsets = [0, 64], sizes = [4, 32], strides = [1, 1]} : vector<4x128xf32> to vector<4x32xf32>
    %263 = vector.extract_strided_slice %258 {offsets = [0, 96], sizes = [4, 32], strides = [1, 1]} : vector<4x128xf32> to vector<4x32xf32>
    %264 = arith.mulf %261, %229 : vector<4x32xf32>
    %265 = arith.mulf %260, %262 : vector<4x32xf32>
    %266 = arith.addf %264, %265 : vector<4x32xf32>
    %267 = math.tanh %266 : vector<4x32xf32>
    %268 = arith.mulf %263, %267 : vector<4x32xf32>
    %cst_48 = arith.constant dense<0.000000e+00> : vector<4x128xf32>
    %269 = tpu.matmul %268, %2, %cst_48 {dimension_numbers = #tpu.dot_dimension_numbers<[1], [0], [0], [1], [0, 0, 1, 1], [], []>} : vector<4x32xf32>, vector<32x128xf32>, vector<4x128xf32> -> vector<4x128xf32>
    %270 = vector.broadcast %3 : vector<1x128xf32> to vector<4x128xf32>
    %271 = arith.addf %269, %270 : vector<4x128xf32>
    %cst_49 = arith.constant dense<0.000000e+00> : vector<4x128xf32>
    %272 = tpu.matmul %251, %0, %cst_49 {dimension_numbers = #tpu.dot_dimension_numbers<[1], [0], [0], [1], [0, 0, 1, 1], [], []>} : vector<4x32xf32>, vector<32x128xf32>, vector<4x128xf32> -> vector<4x128xf32>
    %273 = arith.addf %9, %272 : vector<4x128xf32>
    %274 = arith.negf %273 : vector<4x128xf32>
    %275 = math.exp %274 : vector<4x128xf32>
    %cst_50 = arith.constant 1.000000e+00 : f32
    %276 = vector.broadcast %cst_50 : f32 to vector<4x128xf32>
    %277 = arith.addf %276, %275 : vector<4x128xf32>
    %278 = arith.divf %276, %277 : vector<4x128xf32>
    %279 = math.tanh %273 : vector<4x128xf32>
    %280 = vector.extract_strided_slice %278 {offsets = [0, 0], sizes = [4, 32], strides = [1, 1]} : vector<4x128xf32> to vector<4x32xf32>
    %281 = vector.extract_strided_slice %278 {offsets = [0, 32], sizes = [4, 32], strides = [1, 1]} : vector<4x128xf32> to vector<4x32xf32>
    %282 = vector.extract_strided_slice %279 {offsets = [0, 64], sizes = [4, 32], strides = [1, 1]} : vector<4x128xf32> to vector<4x32xf32>
    %283 = vector.extract_strided_slice %278 {offsets = [0, 96], sizes = [4, 32], strides = [1, 1]} : vector<4x128xf32> to vector<4x32xf32>
    %284 = arith.mulf %281, %249 : vector<4x32xf32>
    %285 = arith.mulf %280, %282 : vector<4x32xf32>
    %286 = arith.addf %284, %285 : vector<4x32xf32>
    %287 = math.tanh %286 : vector<4x32xf32>
    %288 = arith.mulf %283, %287 : vector<4x32xf32>
    %cst_51 = arith.constant dense<0.000000e+00> : vector<4x128xf32>
    %289 = tpu.matmul %288, %1, %cst_51 {dimension_numbers = #tpu.dot_dimension_numbers<[1], [0], [0], [1], [0, 0, 1, 1], [], []>} : vector<4x32xf32>, vector<32x128xf32>, vector<4x128xf32> -> vector<4x128xf32>
    %290 = arith.addf %289, %271 : vector<4x128xf32>
    %291 = arith.negf %290 : vector<4x128xf32>
    %292 = math.exp %291 : vector<4x128xf32>
    %cst_52 = arith.constant 1.000000e+00 : f32
    %293 = vector.broadcast %cst_52 : f32 to vector<4x128xf32>
    %294 = arith.addf %293, %292 : vector<4x128xf32>
    %295 = arith.divf %293, %294 : vector<4x128xf32>
    %296 = math.tanh %290 : vector<4x128xf32>
    %297 = vector.extract_strided_slice %295 {offsets = [0, 0], sizes = [4, 32], strides = [1, 1]} : vector<4x128xf32> to vector<4x32xf32>
    %298 = vector.extract_strided_slice %295 {offsets = [0, 32], sizes = [4, 32], strides = [1, 1]} : vector<4x128xf32> to vector<4x32xf32>
    %299 = vector.extract_strided_slice %296 {offsets = [0, 64], sizes = [4, 32], strides = [1, 1]} : vector<4x128xf32> to vector<4x32xf32>
    %300 = vector.extract_strided_slice %295 {offsets = [0, 96], sizes = [4, 32], strides = [1, 1]} : vector<4x128xf32> to vector<4x32xf32>
    %301 = arith.mulf %298, %266 : vector<4x32xf32>
    %302 = arith.mulf %297, %299 : vector<4x32xf32>
    %303 = arith.addf %301, %302 : vector<4x32xf32>
    %304 = math.tanh %303 : vector<4x32xf32>
    %305 = arith.mulf %300, %304 : vector<4x32xf32>
    %306 = tpu.concatenate %46, %83, %120, %157, %194, %231, %268, %305 in 1 : vector<4x32xf32>, vector<4x32xf32>, vector<4x32xf32>, vector<4x32xf32>, vector<4x32xf32>, vector<4x32xf32>, vector<4x32xf32>, vector<4x32xf32> -> vector<4x256xf32>
    %c0_53 = arith.constant 0 : index
    %c0_54 = arith.constant 0 : index
    %307 = vector.load %arg7[%c0_53, %c0_54] : memref<256x128xf32, #tpu.memory_space<vmem>>, vector<256x128xf32>
    %cst_55 = arith.constant dense<0.000000e+00> : vector<4x128xf32>
    %308 = tpu.matmul %306, %307, %cst_55 {dimension_numbers = #tpu.dot_dimension_numbers<[1], [0], [0], [1], [0, 0, 1, 1], [], []>} : vector<4x256xf32>, vector<256x128xf32>, vector<4x128xf32> -> vector<4x128xf32>
    %c0_56 = arith.constant 0 : index
    %c0_57 = arith.constant 0 : index
    %309 = vector.load %arg8[%c0_56, %c0_57] : memref<1x128xf32, #tpu.memory_space<vmem>>, vector<1x128xf32>
    %310 = vector.broadcast %309 : vector<1x128xf32> to vector<4x128xf32>
    %311 = arith.addf %308, %310 : vector<4x128xf32>
    %c0_58 = arith.constant 0 : index
    %c0_59 = arith.constant 0 : index
    %312 = vector.load %arg9[%c0_58, %c0_59] : memref<4x128xf32, #tpu.memory_space<vmem>>, vector<4x128xf32>
    tpu.vector_store %arg9[%c0_58, %c0_59], %311 {strides = array<i32>} : memref<4x128xf32, #tpu.memory_space<vmem>>, vector<4x128xf32>,
    return
  }
}

</mosaic_0001>

<llo_original>
// kernel: tpu_custom_call.1
$region0: #{tpu_custom_call.1}
  #allocation0 [shape = 'u32[]', space=smem, size = 0x4, offset = 0x4, fixed_abs, tag = 'smem constant byte address 0x4 - core index']
  #allocation1 [shape = 'u32[72,128]{1,0:T(1,128)}', space=vmem, size = 0x9000, scoped, tag = 'internal scratch']
  %s0 = inlined_call_operand.hbm [shape: f32[4,16], index: 0, kind: input, shape index: {}]
  %s1 = inlined_call_operand.hbm [shape: f32[16,128], index: 1, kind: input, shape index: {}]
  %s2 = inlined_call_operand.hbm [shape: f32[32,128], index: 2, kind: input, shape index: {}]
  %s3 = inlined_call_operand.vmem [shape: f32[1,128], index: 3, kind: input, shape index: {}]
  %s4 = inlined_call_operand.hbm [shape: f32[32,128], index: 4, kind: input, shape index: {}]
  %s5 = inlined_call_operand.hbm [shape: f32[32,128], index: 5, kind: input, shape index: {}]
  %s6 = inlined_call_operand.vmem [shape: f32[1,128], index: 6, kind: input, shape index: {}]
  %s7 = inlined_call_operand.hbm [shape: f32[256,128], index: 7, kind: input, shape index: {}]
  %s8 = inlined_call_operand.vmem [shape: f32[1,128], index: 8, kind: input, shape index: {}]
  %s9 = inlined_call_operand.hbm [shape: f32[4,128], index: 9, kind: output, shape index: {}]
  %s10 = sld [smem:[#allocation0]]
  $region70: #{tpu_custom_call.1} parent=0
    _
  %s12 = ssub.s32 1, %s10
  %s13 = scalar_select 0, %s12, %s10
  $region1: #{tpu_custom_call.1} parent=0
    #allocation2 [shape = 'u8[2048]{0}', space=vmem, size = 0x800, scoped, tag = 'input window, operand 0, single buffered']
    #allocation3 [shape = 's32[1]{0}', space=sflag, size = 0x4, scoped, tag = 'scoped memory for tpu_custom_call.1']
    #allocation4 [shape = 's32[1]{0}', space=sflag, size = 0x4, scoped, tag = 'scoped memory for tpu_custom_call.1']
    #allocation5 [shape = 'u8[8192]{0}', space=vmem, size = 0x2000, scoped, tag = 'input window, operand 1, single buffered']
    #allocation6 [shape = 's32[1]{0}', space=sflag, size = 0x4, scoped, tag = 'scoped memory for tpu_custom_call.1']
    #allocation7 [shape = 'u8[16384]{0}', space=vmem, size = 0x4000, scoped, tag = 'input window, operand 2, single buffered']
    #allocation8 [shape = 'u8[16384]{0}', space=vmem, size = 0x4000, scoped, tag = 'input window, operand 4, single buffered']
    #allocation9 [shape = 's32[1]{0}', space=sflag, size = 0x4, scoped, tag = 'scoped memory for tpu_custom_call.1']
    #allocation10 [shape = 'u8[16384]{0}', space=vmem, size = 0x4000, scoped, tag = 'input window, operand 5, single buffered']
    #allocation11 [shape = 'u8[131072]{0}', space=vmem, size = 0x20000, scoped, tag = 'input window, operand 7, single buffered']
    #allocation12 [shape = 's32[1]{0}', space=sflag, size = 0x4, scoped, tag = 'scoped memory for tpu_custom_call.1']
    #allocation13 [shape = 'u8[2048]{0}', space=vmem, size = 0x800, scoped, tag = 'output window, operand 0, single buffered']
    %14 = vsyncpa [#allocation3], 0
    %15 = vsyncpa [#allocation6], 0
    %16 = vsyncpa [#allocation9], 0
    %17 = vsyncpa [#allocation12], 0
    %18 = vsyncpa [#allocation4], 0
    // Predicated region
    $region2: #{tpu_custom_call.1} parent=1 // pred_check
      _
    $region3: #{tpu_custom_call.1} parent=1 // pred_check_branch
      %20 = sbr.rel (0) target = $region5
    $region4: #{tpu_custom_call.1} parent=1 // pred_region
      %22 = vsyncadd [#allocation3], 0
      %s24 = sshll.u32 %s0, 4
      %s25 = int_to_ptr.hbm [resolvable:$true] %s24
      %s26 = sshll.u32 [#allocation2], 4
      %s27 = int_to_ptr.vmem [resolvable:$true] %s26
      %29 = dma.hbm_to_vmem [thread:$0]  %s25, 64, %s27, [#allocation3]
    $region5: #{tpu_custom_call.1} parent=1 // pred_fallthru
      _
    // Predicated region
    $region6: #{tpu_custom_call.1} parent=1 // pred_check
      _
    $region7: #{tpu_custom_call.1} parent=1 // pred_check_branch
      %31 = sbr.rel (0) target = $region9
    $region8: #{tpu_custom_call.1} parent=1 // pred_region
      %33 = vsyncadd [#allocation6], 0
      %s34 = sshll.u32 %s1, 4
      %s35 = int_to_ptr.hbm [resolvable:$true] %s34
      %s36 = sshll.u32 [#allocation5], 4
      %s37 = int_to_ptr.vmem [resolvable:$true] %s36
      %42 = dma.hbm_to_vmem [thread:$0]  %s35, 256, %s37, [#allocation6], 128, 128, 8
    $region9: #{tpu_custom_call.1} parent=1 // pred_fallthru
      _
    // Predicated region
    $region10: #{tpu_custom_call.1} parent=1 // pred_check
      _
    $region11: #{tpu_custom_call.1} parent=1 // pred_check_branch
      %44 = sbr.rel (0) target = $region13
    $region12: #{tpu_custom_call.1} parent=1 // pred_region
      %46 = vsyncadd [#allocation6], 0
      %s47 = sshll.u32 %s2, 4
      %s48 = int_to_ptr.hbm [resolvable:$true] %s47
      %s49 = sshll.u32 [#allocation7], 4
      %s50 = int_to_ptr.vmem [resolvable:$true] %s49
      %55 = dma.hbm_to_vmem [thread:$0]  %s48, 512, %s50, [#allocation6], 128, 128, 8
    $region13: #{tpu_custom_call.1} parent=1 // pred_fallthru
      _
    // Predicated region
    $region14: #{tpu_custom_call.1} parent=1 // pred_check
      _
    $region15: #{tpu_custom_call.1} parent=1 // pred_check_branch
      %57 = sbr.rel (0) target = $region17
    $region16: #{tpu_custom_call.1} parent=1 // pred_region
      _
    $region17: #{tpu_custom_call.1} parent=1 // pred_fallthru
      _
    // Predicated region
    $region18: #{tpu_custom_call.1} parent=1 // pred_check
      _
    $region19: #{tpu_custom_call.1} parent=1 // pred_check_branch
      %59 = sbr.rel (0) target = $region21
    $region20: #{tpu_custom_call.1} parent=1 // pred_region
      %61 = vsyncadd [#allocation9], 0
      %s62 = sshll.u32 %s4, 4
      %s63 = int_to_ptr.hbm [resolvable:$true] %s62
      %s64 = sshll.u32 [#allocation8], 4
      %s65 = int_to_ptr.vmem [resolvable:$true] %s64
      %70 = dma.hbm_to_vmem [thread:$0]  %s63, 512, %s65, [#allocation9], 128, 128, 8
    $region21: #{tpu_custom_call.1} parent=1 // pred_fallthru
      _
    // Predicated region
    $region22: #{tpu_custom_call.1} parent=1 // pred_check
      _
    $region23: #{tpu_custom_call.1} parent=1 // pred_check_branch
      %72 = sbr.rel (0) target = $region25
    $region24: #{tpu_custom_call.1} parent=1 // pred_region
      %74 = vsyncadd [#allocation9], 0
      %s75 = sshll.u32 %s5, 4
      %s76 = int_to_ptr.hbm [resolvable:$true] %s75
      %s77 = sshll.u32 [#allocation10], 4
      %s78 = int_to_ptr.vmem [resolvable:$true] %s77
      %83 = dma.hbm_to_vmem [thread:$0]  %s76, 512, %s78, [#allocation9], 128, 128, 8
    $region25: #{tpu_custom_call.1} parent=1 // pred_fallthru
      _
    // Predicated region
    $region26: #{tpu_custom_call.1} parent=1 // pred_check
      _
    $region27: #{tpu_custom_call.1} parent=1 // pred_check_branch
      %85 = sbr.rel (0) target = $region29
    $region28: #{tpu_custom_call.1} parent=1 // pred_region
      _
    $region29: #{tpu_custom_call.1} parent=1 // pred_fallthru
      _
    // Predicated region
    $region30: #{tpu_custom_call.1} parent=1 // pred_check
      _
    $region31: #{tpu_custom_call.1} parent=1 // pred_check_branch
      %87 = sbr.rel (0) target = $region33
    $region32: #{tpu_custom_call.1} parent=1 // pred_region
      %89 = vsyncadd [#allocation12], 0
      %s90 = sshll.u32 %s7, 4
      %s91 = int_to_ptr.hbm [resolvable:$true] %s90
      %s92 = sshll.u32 [#allocation11], 4
      %s93 = int_to_ptr.vmem [resolvable:$true] %s92
      %98 = dma.hbm_to_vmem [thread:$0]  %s91, 4096, %s93, [#allocation12], 128, 128, 8
    $region33: #{tpu_custom_call.1} parent=1 // pred_fallthru
      _
    // Predicated region
    $region34: #{tpu_custom_call.1} parent=1 // pred_check
      _
    $region35: #{tpu_custom_call.1} parent=1 // pred_check_branch
      %100 = sbr.rel (0) target = $region37
    $region36: #{tpu_custom_call.1} parent=1 // pred_region
      _
    $region37: #{tpu_custom_call.1} parent=1 // pred_fallthru
      _
    // Predicated region
    $region38: #{tpu_custom_call.1} parent=1 // pred_check
      _
    $region39: #{tpu_custom_call.1} parent=1 // pred_check_branch
      %102 = sbr.rel (0) target = $region41
    $region40: #{tpu_custom_call.1} parent=1 // pred_region
      %104 = dma.done [#allocation3], 64
    $region41: #{tpu_custom_call.1} parent=1 // pred_fallthru
      _
    // Predicated region
    $region42: #{tpu_custom_call.1} parent=1 // pred_check
      _
    $region43: #{tpu_custom_call.1} parent=1 // pred_check_branch
      %106 = sbr.rel (0) target = $region45
    $region44: #{tpu_custom_call.1} parent=1 // pred_region
      %108 = dma.done [#allocation6], 256
    $region45: #{tpu_custom_call.1} parent=1 // pred_fallthru
      _
    // Predicated region
    $region46: #{tpu_custom_call.1} parent=1 // pred_check
      _
    $region47: #{tpu_custom_call.1} parent=1 // pred_check_branch
      %110 = sbr.rel (0) target = $region49
    $region48: #{tpu_custom_call.1} parent=1 // pred_region
      %112 = dma.done [#allocation6], 512
    $region49: #{tpu_custom_call.1} parent=1 // pred_fallthru
      _
    // Predicated region
    $region50: #{tpu_custom_call.1} parent=1 // pred_check
      _
    $region51: #{tpu_custom_call.1} parent=1 // pred_check_branch
      %114 = sbr.rel (0) target = $region53
    $region52: #{tpu_custom_call.1} parent=1 // pred_region
      %116 = dma.done [#allocation9], 512
    $region53: #{tpu_custom_call.1} parent=1 // pred_fallthru
      _
    // Predicated region
    $region54: #{tpu_custom_call.1} parent=1 // pred_check
      _
    $region55: #{tpu_custom_call.1} parent=1 // pred_check_branch
      %118 = sbr.rel (0) target = $region57
    $region56: #{tpu_custom_call.1} parent=1 // pred_region
      %120 = dma.done [#allocation9], 512
    $region57: #{tpu_custom_call.1} parent=1 // pred_fallthru
      _
    // Predicated region
    $region58: #{tpu_custom_call.1} parent=1 // pred_check
      _
    $region59: #{tpu_custom_call.1} parent=1 // pred_check_branch
      %122 = sbr.rel (0) target = $region61
    $region60: #{tpu_custom_call.1} parent=1 // pred_region
      %124 = dma.done [#allocation12], 4096
    $region61: #{tpu_custom_call.1} parent=1 // pred_fallthru
      _
    %v125 = vld [vmem:[#allocation7] sm:$0xff]
    %v126 = vld [vmem:[#allocation7 + $0x8] sm:$0xff]
    %v127 = vld [vmem:[#allocation7 + $0x10] sm:$0xff]
    %v128 = vld [vmem:[#allocation7 + $0x18] sm:$0xff]
    %v129 = vld [vmem:[#allocation8] sm:$0xff]
    %v130 = vld [vmem:[#allocation8 + $0x8] sm:$0xff]
    %v131 = vld [vmem:[#allocation8 + $0x10] sm:$0xff]
    %v132 = vld [vmem:[#allocation8 + $0x18] sm:$0xff]
    %v133 = vld [vmem:[#allocation10] sm:$0xff]
    %v134 = vld [vmem:[#allocation10 + $0x8] sm:$0xff]
    %v135 = vld [vmem:[#allocation10 + $0x10] sm:$0xff]
    %v136 = vld [vmem:[#allocation10 + $0x18] sm:$0xff]
    %v137 = vld [vmem:[%s6] sm:$0x1]
    %v138 = vld [vmem:[#allocation2] sm:$0xf]
    %v139 = vld [vmem:[#allocation5] sm:$0xff]
    %v140 = vld [vmem:[#allocation5 + $0x8] sm:$0xff]
    %v141 = vld [vmem:[%s3] sm:$0x1]
    %v143 = vperm.slane %v141, 0
    %vm145 = vcmask 130048
    %v147 = vsel %vm145, %v138, 0
    %149 = vmatpush.msra.mxu0 0.0
    %150 = vmatpush.msra.mxu0 0.0
    %151 = vmatpush.msra.mxu0 0.0
    %152 = vmatpush.msra.mxu0 0.0
    %153 = vmatpush.msra.mxu0 0.0
    %154 = vmatpush.msra.mxu0 0.0
    %155 = vmatpush.msra.mxu0 0.0
    %156 = vmatpush.msra.mxu0 0.0
    %157 = vmatpush.msra.mxu0 0.0
    %158 = vmatpush.msra.mxu0 0.0
    %159 = vmatpush.msra.mxu0 0.0
    %160 = vmatpush.msra.mxu0 0.0
    %161 = vmatpush.msra.mxu0 0.0
    %162 = vmatpush.msra.mxu0 0.0
    %163 = vmatpush.msra.mxu0 %v140
    %164 = vmatpush.msra.mxu0 %v139
    %165 = vmatmul.f32.gmra.mxu0 %v147
    %v166 = vpop.f32.mrf.mxu0
    %v167 = vadd.f32 %v143, %v166
    %168 = vdwg.mxu0
    %v170 = vperm.slane %v137, 0
    %vm172 = vcmask 261120
    %v174 = vsel %vm172, 0.0, 0
    %176 = vmatpush.msra.mxu0 0.0
    %177 = vmatpush.msra.mxu0 0.0
    %178 = vmatpush.msra.mxu0 0.0
    %179 = vmatpush.msra.mxu0 0.0
    %180 = vmatpush.msra.mxu0 0.0
    %181 = vmatpush.msra.mxu0 0.0
    %182 = vmatpush.msra.mxu0 0.0
    %183 = vmatpush.msra.mxu0 0.0
    %184 = vmatpush.msra.mxu0 0.0
    %185 = vmatpush.msra.mxu0 0.0
    %186 = vmatpush.msra.mxu0 0.0
    %187 = vmatpush.msra.mxu0 0.0
    %188 = vmatpush.msra.mxu0 %v128
    %189 = vmatpush.msra.mxu0 %v127
    %190 = vmatpush.msra.mxu0 %v126
    %191 = vmatpush.msra.mxu0 %v125
    %192 = vmatmul.f32.gmra.mxu0 %v174
    %v193 = vpop.f32.mrf.mxu0
    %v194 = vadd.f32 0.0, %v193
    %195 = vdwg.mxu0
    %v196 = vadd.f32 %v167, %v194
    %v197 = vxor.u32 %v196, 2147483648
    %v198 = vmul.f32 %v197, 1.442695
    %v199 = vpow.pop %v198
    %v200 = vadd.f32 %v199, 1.0
    %v201 = vrcp.pop %v200
    %v202 = vmul.f32 %v200, %v201
    %v203 = vsub.f32 1.0, %v202
    %v204 = vmul.f32 %v201, %v203
    %v205 = vadd.f32 %v201, %v204
    %vm206 = vweird.f32 %v200
    %vm207 = vweird.f32 %v201
    %vm208 = vmor %vm206, %vm207
    %v209 = vsel %vm208, %v201, %v205
    %v210 = vand.u32 2147483647, %v200
    %vm211 = vcmp.eq.f32.partialorder %v210, 8.507059e+37
    %v212 = vand.u32 %v200, 2147483648
    %v213 = vor.u32 1.1754944e-38, %v212
    %v214 = vsel %vm211, %v213, %v209
    %v215 = vmul.f32 1.0, %v214
    %v216 = vtanh.pop %v196
    %v217 = vmul.f32 %v215, 0.0
    %219 = vrot.lane.b32.xlu0 %v216, 64
    %v220 = vpop.permute.xlu0 %219
    %v222 = vmul.f32 %v215, %v220
    %224 = vrot.lane.b32.xlu0 %v222, 32
    %v225 = vpop.permute.xlu0 %224
    %v227 = vadd.f32 %v217, %v225
    %v228 = vtanh.pop %v227
    %230 = vrot.lane.b32.xlu0 %v228, 64
    %v231 = vpop.permute.xlu0 %230
    %v233 = vmul.f32 %v215, %v231
    %235 = vrot.lane.b32.xlu0 %v233, 32
    %v236 = vpop.permute.xlu0 %235
    %v237 = vsel %vm172, %v236, 0
    %239 = vmatpush.msra.mxu0 0.0
    %240 = vmatpush.msra.mxu0 0.0
    %241 = vmatpush.msra.mxu0 0.0
    %242 = vmatpush.msra.mxu0 0.0
    %243 = vmatpush.msra.mxu0 0.0
    %244 = vmatpush.msra.mxu0 0.0
    %245 = vmatpush.msra.mxu0 0.0
    %246 = vmatpush.msra.mxu0 0.0
    %247 = vmatpush.msra.mxu0 0.0
    %248 = vmatpush.msra.mxu0 0.0
    %249 = vmatpush.msra.mxu0 0.0
    %250 = vmatpush.msra.mxu0 0.0
    %251 = vmatpush.msra.mxu0 %v132
    %252 = vmatpush.msra.mxu0 %v131
    %253 = vmatpush.msra.mxu0 %v130
    %254 = vmatpush.msra.mxu0 %v129
    %255 = vmatmul.f32.gmra.mxu0 %v237
    %v256 = vpop.f32.mrf.mxu0
    %v257 = vadd.f32 %v170, %v256
    %258 = vdwg.mxu0
    %v259 = vxor.u32 %v257, 2147483648
    %v260 = vmul.f32 %v259, 1.442695
    %v261 = vpow.pop %v260
    %v262 = vadd.f32 %v261, 1.0
    %v263 = vrcp.pop %v262
    %v264 = vmul.f32 %v262, %v263
    %v265 = vsub.f32 1.0, %v264
    %v266 = vmul.f32 %v263, %v265
    %v267 = vadd.f32 %v263, %v266
    %vm268 = vweird.f32 %v262
    %vm269 = vweird.f32 %v263
    %vm270 = vmor %vm268, %vm269
    %v271 = vsel %vm270, %v263, %v267
    %v272 = vand.u32 2147483647, %v262
    %vm273 = vcmp.eq.f32.partialorder %v272, 8.507059e+37
    %v274 = vand.u32 %v262, 2147483648
    %v275 = vor.u32 1.1754944e-38, %v274
    %v276 = vsel %vm273, %v275, %v271
    %v277 = vmul.f32 1.0, %v276
    %v278 = vtanh.pop %v257
    %v279 = vmul.f32 %v277, 0.0
    %281 = vrot.lane.b32.xlu0 %v278, 64
    %v282 = vpop.permute.xlu0 %281
    %v284 = vmul.f32 %v277, %v282
    %286 = vrot.lane.b32.xlu0 %v284, 32
    %v287 = vpop.permute.xlu0 %286
    %v289 = vadd.f32 %v279, %v287
    %v290 = vtanh.pop %v289
    %292 = vrot.lane.b32.xlu0 %v290, 64
    %v293 = vpop.permute.xlu0 %292
    %v295 = vmul.f32 %v277, %v293
    %297 = vrot.lane.b32.xlu0 %v295, 32
    %v298 = vpop.permute.xlu0 %297
    %v299 = vsel %vm172, %v298, 0
    %301 = vmatpush.msra.mxu0 0.0
    %302 = vmatpush.msra.mxu0 0.0
    %303 = vmatpush.msra.mxu0 0.0
    %304 = vmatpush.msra.mxu0 0.0
    %305 = vmatpush.msra.mxu0 0.0
    %306 = vmatpush.msra.mxu0 0.0
    %307 = vmatpush.msra.mxu0 0.0
    %308 = vmatpush.msra.mxu0 0.0
    %309 = vmatpush.msra.mxu0 0.0
    %310 = vmatpush.msra.mxu0 0.0
    %311 = vmatpush.msra.mxu0 0.0
    %312 = vmatpush.msra.mxu0 0.0
    %313 = vmatpush.msra.mxu0 %v136
    %314 = vmatpush.msra.mxu0 %v135
    %315 = vmatpush.msra.mxu0 %v134
    %316 = vmatpush.msra.mxu0 %v133
    %317 = vmatmul.f32.gmra.mxu0 %v299
    %v318 = vpop.f32.mrf.mxu0
    %v319 = vadd.f32 %v170, %v318
    %320 = vdwg.mxu0
    %321 = vmatpush.msra.mxu0 0.0
    %322 = vmatpush.msra.mxu0 0.0
    %323 = vmatpush.msra.mxu0 0.0
    %324 = vmatpush.msra.mxu0 0.0
    %325 = vmatpush.msra.mxu0 0.0
    %326 = vmatpush.msra.mxu0 0.0
    %327 = vmatpush.msra.mxu0 0.0
    %328 = vmatpush.msra.mxu0 0.0
    %329 = vmatpush.msra.mxu0 0.0
    %330 = vmatpush.msra.mxu0 0.0
    %331 = vmatpush.msra.mxu0 0.0
    %332 = vmatpush.msra.mxu0 0.0
    %333 = vmatpush.msra.mxu0 %v128
    %334 = vmatpush.msra.mxu0 %v127
    %335 = vmatpush.msra.mxu0 %v126
    %336 = vmatpush.msra.mxu0 %v125
    %337 = vmatmul.f32.gmra.mxu0 %v237
    %v338 = vpop.f32.mrf.mxu0
    %v339 = vadd.f32 0.0, %v338
    %340 = vdwg.mxu0
    %v341 = vadd.f32 %v167, %v339
    %v342 = vxor.u32 %v341, 2147483648
    %v343 = vmul.f32 %v342, 1.442695
    %v344 = vpow.pop %v343
    %v345 = vadd.f32 %v344, 1.0
    %v346 = vrcp.pop %v345
    %v347 = vmul.f32 %v345, %v346
    %v348 = vsub.f32 1.0, %v347
    %v349 = vmul.f32 %v346, %v348
    %v350 = vadd.f32 %v346, %v349
    %vm351 = vweird.f32 %v345
    %vm352 = vweird.f32 %v346
    %vm353 = vmor %vm351, %vm352
    %v354 = vsel %vm353, %v346, %v350
    %v355 = vand.u32 2147483647, %v345
    %vm356 = vcmp.eq.f32.partialorder %v355, 8.507059e+37
    %v357 = vand.u32 %v345, 2147483648
    %v358 = vor.u32 1.1754944e-38, %v357
    %v359 = vsel %vm356, %v358, %v354
    %v360 = vmul.f32 1.0, %v359
    %v361 = vtanh.pop %v341
    %v362 = vmul.f32 %v360, %v227
    %364 = vrot.lane.b32.xlu0 %v361, 64
    %v365 = vpop.permute.xlu0 %364
    %v367 = vmul.f32 %v360, %v365
    %369 = vrot.lane.b32.xlu0 %v367, 32
    %v370 = vpop.permute.xlu0 %369
    %v372 = vadd.f32 %v362, %v370
    %v373 = vtanh.pop %v372
    %375 = vrot.lane.b32.xlu0 %v373, 64
    %v376 = vpop.permute.xlu0 %375
    %v378 = vmul.f32 %v360, %v376
    %380 = vrot.lane.b32.xlu0 %v378, 32
    %v381 = vpop.permute.xlu0 %380
    %v382 = vsel %vm172, %v381, 0
    %384 = vmatpush.msra.mxu0 0.0
    %385 = vmatpush.msra.mxu0 0.0
    %386 = vmatpush.msra.mxu0 0.0
    %387 = vmatpush.msra.mxu0 0.0
    %388 = vmatpush.msra.mxu0 0.0
    %389 = vmatpush.msra.mxu0 0.0
    %390 = vmatpush.msra.mxu0 0.0
    %391 = vmatpush.msra.mxu0 0.0
    %392 = vmatpush.msra.mxu0 0.0
    %393 = vmatpush.msra.mxu0 0.0
    %394 = vmatpush.msra.mxu0 0.0
    %395 = vmatpush.msra.mxu0 0.0
    %396 = vmatpush.msra.mxu0 %v132
    %397 = vmatpush.msra.mxu0 %v131
    %398 = vmatpush.msra.mxu0 %v130
    %399 = vmatpush.msra.mxu0 %v129
    %400 = vmatmul.f32.gmra.mxu0 %v382
    %v401 = vpop.f32.mrf.mxu0
    %v402 = vadd.f32 %v319, %v401
    %403 = vdwg.mxu0
    %v404 = vxor.u32 %v402, 2147483648
    %v405 = vmul.f32 %v404, 1.442695
    %v406 = vpow.pop %v405
    %v407 = vadd.f32 %v406, 1.0
    %v408 = vrcp.pop %v407
    %v409 = vmul.f32 %v407, %v408
    %v410 = vsub.f32 1.0, %v409
    %v411 = vmul.f32 %v408, %v410
    %v412 = vadd.f32 %v408, %v411
    %vm413 = vweird.f32 %v407
    %vm414 = vweird.f32 %v408
    %vm415 = vmor %vm413, %vm414
    %v416 = vsel %vm415, %v408, %v412
    %v417 = vand.u32 2147483647, %v407
    %vm418 = vcmp.eq.f32.partialorder %v417, 8.507059e+37
    %v419 = vand.u32 %v407, 2147483648
    %v420 = vor.u32 1.1754944e-38, %v419
    %v421 = vsel %vm418, %v420, %v416
    %v422 = vmul.f32 1.0, %v421
    %v423 = vtanh.pop %v402
    %v424 = vmul.f32 %v422, %v289
    %426 = vrot.lane.b32.xlu0 %v423, 64
    %v427 = vpop.permute.xlu0 %426
    %v429 = vmul.f32 %v422, %v427
    %431 = vrot.lane.b32.xlu0 %v429, 32
    %v432 = vpop.permute.xlu0 %431
    %v434 = vadd.f32 %v424, %v432
    %v435 = vtanh.pop %v434
    %437 = vrot.lane.b32.xlu0 %v435, 64
    %v438 = vpop.permute.xlu0 %437
    %v440 = vmul.f32 %v422, %v438
    %442 = vrot.lane.b32.xlu0 %v440, 32
    %v443 = vpop.permute.xlu0 %442
    %v444 = vsel %vm172, %v443, 0
    %446 = vmatpush.msra.mxu0 0.0
    %447 = vmatpush.msra.mxu0 0.0
    %448 = vmatpush.msra.mxu0 0.0
    %449 = vmatpush.msra.mxu0 0.0
    %450 = vmatpush.msra.mxu0 0.0
    %451 = vmatpush.msra.mxu0 0.0
    %452 = vmatpush.msra.mxu0 0.0
    %453 = vmatpush.msra.mxu0 0.0
    %454 = vmatpush.msra.mxu0 0.0
    %455 = vmatpush.msra.mxu0 0.0
    %456 = vmatpush.msra.mxu0 0.0
    %457 = vmatpush.msra.mxu0 0.0
    %458 = vmatpush.msra.mxu0 %v136
    %459 = vmatpush.msra.mxu0 %v135
    %460 = vmatpush.msra.mxu0 %v134
    %461 = vmatpush.msra.mxu0 %v133
    %462 = vmatmul.f32.gmra.mxu0 %v444
    %v463 = vpop.f32.mrf.mxu0
    %v464 = vadd.f32 %v170, %v463
    %465 = vdwg.mxu0
    %466 = vmatpush.msra.mxu0 0.0
    %467 = vmatpush.msra.mxu0 0.0
    %468 = vmatpush.msra.mxu0 0.0
    %469 = vmatpush.msra.mxu0 0.0
    %470 = vmatpush.msra.mxu0 0.0
    %471 = vmatpush.msra.mxu0 0.0
    %472 = vmatpush.msra.mxu0 0.0
    %473 = vmatpush.msra.mxu0 0.0
    %474 = vmatpush.msra.mxu0 0.0
    %475 = vmatpush.msra.mxu0 0.0
    %476 = vmatpush.msra.mxu0 0.0
    %477 = vmatpush.msra.mxu0 0.0
    %478 = vmatpush.msra.mxu0 %v128
    %479 = vmatpush.msra.mxu0 %v127
    %480 = vmatpush.msra.mxu0 %v126
    %481 = vmatpush.msra.mxu0 %v125
    %482 = vmatmul.f32.gmra.mxu0 %v382
    %v483 = vpop.f32.mrf.mxu0
    %v484 = vadd.f32 0.0, %v483
    %485 = vdwg.mxu0
    %v486 = vadd.f32 %v167, %v484
    %v487 = vxor.u32 %v486, 2147483648
    %v488 = vmul.f32 %v487, 1.442695
    %v489 = vpow.pop %v488
    %v490 = vadd.f32 %v489, 1.0
    %v491 = vrcp.pop %v490
    %v492 = vmul.f32 %v490, %v491
    %v493 = vsub.f32 1.0, %v492
    %v494 = vmul.f32 %v491, %v493
    %v495 = vadd.f32 %v491, %v494
    %vm496 = vweird.f32 %v490
    %vm497 = vweird.f32 %v491
    %vm498 = vmor %vm496, %vm497
    %v499 = vsel %vm498, %v491, %v495
    %v500 = vand.u32 2147483647, %v490
    %vm501 = vcmp.eq.f32.partialorder %v500, 8.507059e+37
    %v502 = vand.u32 %v490, 2147483648
    %v503 = vor.u32 1.1754944e-38, %v502
    %v504 = vsel %vm501, %v503, %v499
    %v505 = vmul.f32 1.0, %v504
    %v506 = vtanh.pop %v486
    %v507 = vmul.f32 %v505, %v372
    %509 = vrot.lane.b32.xlu0 %v506, 64
    %v510 = vpop.permute.xlu0 %509
    %v512 = vmul.f32 %v505, %v510
    %514 = vrot.lane.b32.xlu0 %v512, 32
    %v515 = vpop.permute.xlu0 %514
    %v517 = vadd.f32 %v507, %v515
    %v518 = vtanh.pop %v517
    %520 = vrot.lane.b32.xlu0 %v518, 64
    %v521 = vpop.permute.xlu0 %520
    %v523 = vmul.f32 %v505, %v521
    %525 = vrot.lane.b32.xlu0 %v523, 32
    %v526 = vpop.permute.xlu0 %525
    %v527 = vsel %vm172, %v526, 0
    %529 = vmatpush.msra.mxu0 0.0
    %530 = vmatpush.msra.mxu0 0.0
    %531 = vmatpush.msra.mxu0 0.0
    %532 = vmatpush.msra.mxu0 0.0
    %533 = vmatpush.msra.mxu0 0.0
    %534 = vmatpush.msra.mxu0 0.0
    %535 = vmatpush.msra.mxu0 0.0
    %536 = vmatpush.msra.mxu0 0.0
    %537 = vmatpush.msra.mxu0 0.0
    %538 = vmatpush.msra.mxu0 0.0
    %539 = vmatpush.msra.mxu0 0.0
    %540 = vmatpush.msra.mxu0 0.0
    %541 = vmatpush.msra.mxu0 %v132
    %542 = vmatpush.msra.mxu0 %v131
    %543 = vmatpush.msra.mxu0 %v130
    %544 = vmatpush.msra.mxu0 %v129
    %545 = vmatmul.f32.gmra.mxu0 %v527
    %v546 = vpop.f32.mrf.mxu0
    %v547 = vadd.f32 %v464, %v546
    %548 = vdwg.mxu0
    %v549 = vxor.u32 %v547, 2147483648
    %v550 = vmul.f32 %v549, 1.442695
    %v551 = vpow.pop %v550
    %v552 = vadd.f32 %v551, 1.0
    %v553 = vrcp.pop %v552
    %v554 = vmul.f32 %v552, %v553
    %v555 = vsub.f32 1.0, %v554
    %v556 = vmul.f32 %v553, %v555
    %v557 = vadd.f32 %v553, %v556
    %vm558 = vweird.f32 %v552
    %vm559 = vweird.f32 %v553
    %vm560 = vmor %vm558, %vm559
    %v561 = vsel %vm560, %v553, %v557
    %v562 = vand.u32 2147483647, %v552
    %vm563 = vcmp.eq.f32.partialorder %v562, 8.507059e+37
    %v564 = vand.u32 %v552, 2147483648
    %v565 = vor.u32 1.1754944e-38, %v564
    %v566 = vsel %vm563, %v565, %v561
    %v567 = vmul.f32 1.0, %v566
    %v568 = vtanh.pop %v547
    %v569 = vmul.f32 %v567, %v434
    %571 = vrot.lane.b32.xlu0 %v568, 64
    %v572 = vpop.permute.xlu0 %571
    %v574 = vmul.f32 %v567, %v572
    %576 = vrot.lane.b32.xlu0 %v574, 32
    %v577 = vpop.permute.xlu0 %576
    %v579 = vadd.f32 %v569, %v577
    %v580 = vtanh.pop %v579
    %582 = vrot.lane.b32.xlu0 %v580, 64
    %v583 = vpop.permute.xlu0 %582
    %v585 = vmul.f32 %v567, %v583
    %587 = vrot.lane.b32.xlu0 %v585, 32
    %v588 = vpop.permute.xlu0 %587
    %v589 = vsel %vm172, %v588, 0
    %591 = vmatpush.msra.mxu0 0.0
    %592 = vmatpush.msra.mxu0 0.0
    %593 = vmatpush.msra.mxu0 0.0
    %594 = vmatpush.msra.mxu0 0.0
    %595 = vmatpush.msra.mxu0 0.0
    %596 = vmatpush.msra.mxu0 0.0
    %597 = vmatpush.msra.mxu0 0.0
    %598 = vmatpush.msra.mxu0 0.0
    %599 = vmatpush.msra.mxu0 0.0
    %600 = vmatpush.msra.mxu0 0.0
    %601 = vmatpush.msra.mxu0 0.0
    %602 = vmatpush.msra.mxu0 0.0
    %603 = vmatpush.msra.mxu0 %v136
    %604 = vmatpush.msra.mxu0 %v135
    %605 = vmatpush.msra.mxu0 %v134
    %606 = vmatpush.msra.mxu0 %v133
    %607 = vmatmul.f32.gmra.mxu0 %v589
    %v608 = vpop.f32.mrf.mxu0
    %v609 = vadd.f32 %v170, %v608
    %610 = vdwg.mxu0
    %611 = vmatpush.msra.mxu0 0.0
    %612 = vmatpush.msra.mxu0 0.0
    %613 = vmatpush.msra.mxu0 0.0
    %614 = vmatpush.msra.mxu0 0.0
    %615 = vmatpush.msra.mxu0 0.0
    %616 = vmatpush.msra.mxu0 0.0
    %617 = vmatpush.msra.mxu0 0.0
    %618 = vmatpush.msra.mxu0 0.0
    %619 = vmatpush.msra.mxu0 0.0
    %620 = vmatpush.msra.mxu0 0.0
    %621 = vmatpush.msra.mxu0 0.0
    %622 = vmatpush.msra.mxu0 0.0
    %623 = vmatpush.msra.mxu0 %v128
    %624 = vmatpush.msra.mxu0 %v127
    %625 = vmatpush.msra.mxu0 %v126
    %626 = vmatpush.msra.mxu0 %v125
    %627 = vmatmul.f32.gmra.mxu0 %v527
    %v628 = vpop.f32.mrf.mxu0
    %v629 = vadd.f32 0.0, %v628
    %630 = vdwg.mxu0
    %v631 = vadd.f32 %v167, %v629
    %v632 = vxor.u32 %v631, 2147483648
    %v633 = vmul.f32 %v632, 1.442695
    %v634 = vpow.pop %v633
    %v635 = vadd.f32 %v634, 1.0
    %v636 = vrcp.pop %v635
    %v637 = vmul.f32 %v635, %v636
    %v638 = vsub.f32 1.0, %v637
    %v639 = vmul.f32 %v636, %v638
    %v640 = vadd.f32 %v636, %v639
    %vm641 = vweird.f32 %v635
    %vm642 = vweird.f32 %v636
    %vm643 = vmor %vm641, %vm642
    %v644 = vsel %vm643, %v636, %v640
    %v645 = vand.u32 2147483647, %v635
    %vm646 = vcmp.eq.f32.partialorder %v645, 8.507059e+37
    %v647 = vand.u32 %v635, 2147483648
    %v648 = vor.u32 1.1754944e-38, %v647
    %v649 = vsel %vm646, %v648, %v644
    %v650 = vmul.f32 1.0, %v649
    %v651 = vtanh.pop %v631
    %v652 = vmul.f32 %v650, %v517
    %654 = vrot.lane.b32.xlu0 %v651, 64
    %v655 = vpop.permute.xlu0 %654
    %v657 = vmul.f32 %v650, %v655
    %659 = vrot.lane.b32.xlu0 %v657, 32
    %v660 = vpop.permute.xlu0 %659
    %v662 = vadd.f32 %v652, %v660
    %v663 = vtanh.pop %v662
    %665 = vrot.lane.b32.xlu0 %v663, 64
    %v666 = vpop.permute.xlu0 %665
    %v668 = vmul.f32 %v650, %v666
    %670 = vrot.lane.b32.xlu0 %v668, 32
    %v671 = vpop.permute.xlu0 %670
    %v672 = vsel %vm172, %v671, 0
    %674 = vmatpush.msra.mxu0 0.0
    %675 = vmatpush.msra.mxu0 0.0
    %676 = vmatpush.msra.mxu0 0.0
    %677 = vmatpush.msra.mxu0 0.0
    %678 = vmatpush.msra.mxu0 0.0
    %679 = vmatpush.msra.mxu0 0.0
    %680 = vmatpush.msra.mxu0 0.0
    %681 = vmatpush.msra.mxu0 0.0
    %682 = vmatpush.msra.mxu0 0.0
    %683 = vmatpush.msra.mxu0 0.0
    %684 = vmatpush.msra.mxu0 0.0
    %685 = vmatpush.msra.mxu0 0.0
    %686 = vmatpush.msra.mxu0 %v132
    %687 = vmatpush.msra.mxu0 %v131
    %688 = vmatpush.msra.mxu0 %v130
    %689 = vmatpush.msra.mxu0 %v129
    %690 = vmatmul.f32.gmra.mxu0 %v672
    %v691 = vpop.f32.mrf.mxu0
    %v692 = vadd.f32 %v609, %v691
    %693 = vdwg.mxu0
    %v694 = vxor.u32 %v692, 2147483648
    %v695 = vmul.f32 %v694, 1.442695
    %v696 = vpow.pop %v695
    %v697 = vadd.f32 %v696, 1.0
    %v698 = vrcp.pop %v697
    %v699 = vmul.f32 %v697, %v698
    %v700 = vsub.f32 1.0, %v699
    %v701 = vmul.f32 %v698, %v700
    %v702 = vadd.f32 %v698, %v701
    %vm703 = vweird.f32 %v697
    %vm704 = vweird.f32 %v698
    %vm705 = vmor %vm703, %vm704
    %v706 = vsel %vm705, %v698, %v702
    %v707 = vand.u32 2147483647, %v697
    %vm708 = vcmp.eq.f32.partialorder %v707, 8.507059e+37
    %v709 = vand.u32 %v697, 2147483648
    %v710 = vor.u32 1.1754944e-38, %v709
    %v711 = vsel %vm708, %v710, %v706
    %v712 = vmul.f32 1.0, %v711
    %v713 = vtanh.pop %v692
    %v714 = vmul.f32 %v712, %v579
    %716 = vrot.lane.b32.xlu0 %v713, 64
    %v717 = vpop.permute.xlu0 %716
    %v719 = vmul.f32 %v712, %v717
    %721 = vrot.lane.b32.xlu0 %v719, 32
    %v722 = vpop.permute.xlu0 %721
    %v724 = vadd.f32 %v714, %v722
    %v725 = vtanh.pop %v724
    %727 = vrot.lane.b32.xlu0 %v725, 64
    %v728 = vpop.permute.xlu0 %727
    %v730 = vmul.f32 %v712, %v728
    %732 = vrot.lane.b32.xlu0 %v730, 32
    %v733 = vpop.permute.xlu0 %732
    %v734 = vsel %vm172, %v733, 0
    %736 = vmatpush.msra.mxu0 0.0
    %737 = vmatpush.msra.mxu0 0.0
    %738 = vmatpush.msra.mxu0 0.0
    %739 = vmatpush.msra.mxu0 0.0
    %740 = vmatpush.msra.mxu0 0.0
    %741 = vmatpush.msra.mxu0 0.0
    %742 = vmatpush.msra.mxu0 0.0
    %743 = vmatpush.msra.mxu0 0.0
    %744 = vmatpush.msra.mxu0 0.0
    %745 = vmatpush.msra.mxu0 0.0
    %746 = vmatpush.msra.mxu0 0.0
    %747 = vmatpush.msra.mxu0 0.0
    %748 = vmatpush.msra.mxu0 %v136
    %749 = vmatpush.msra.mxu0 %v135
    %750 = vmatpush.msra.mxu0 %v134
    %751 = vmatpush.msra.mxu0 %v133
    %752 = vmatmul.f32.gmra.mxu0 %v734
    %v753 = vpop.f32.mrf.mxu0
    %v754 = vadd.f32 %v170, %v753
    %755 = vdwg.mxu0
    %756 = vmatpush.msra.mxu0 0.0
    %757 = vmatpush.msra.mxu0 0.0
    %758 = vmatpush.msra.mxu0 0.0
    %759 = vmatpush.msra.mxu0 0.0
    %760 = vmatpush.msra.mxu0 0.0
    %761 = vmatpush.msra.mxu0 0.0
    %762 = vmatpush.msra.mxu0 0.0
    %763 = vmatpush.msra.mxu0 0.0
    %764 = vmatpush.msra.mxu0 0.0
    %765 = vmatpush.msra.mxu0 0.0
    %766 = vmatpush.msra.mxu0 0.0
    %767 = vmatpush.msra.mxu0 0.0
    %768 = vmatpush.msra.mxu0 %v128
    %769 = vmatpush.msra.mxu0 %v127
    %770 = vmatpush.msra.mxu0 %v126
    %771 = vmatpush.msra.mxu0 %v125
    %772 = vmatmul.f32.gmra.mxu0 %v672
    %v773 = vpop.f32.mrf.mxu0
    %v774 = vadd.f32 0.0, %v773
    %775 = vdwg.mxu0
    %v776 = vadd.f32 %v167, %v774
    %v777 = vxor.u32 %v776, 2147483648
    %v778 = vmul.f32 %v777, 1.442695
    %v779 = vpow.pop %v778
    %v780 = vadd.f32 %v779, 1.0
    %v781 = vrcp.pop %v780
    %v782 = vmul.f32 %v780, %v781
    %v783 = vsub.f32 1.0, %v782
    %v784 = vmul.f32 %v781, %v783
    %v785 = vadd.f32 %v781, %v784
    %vm786 = vweird.f32 %v780
    %vm787 = vweird.f32 %v781
    %vm788 = vmor %vm786, %vm787
    %v789 = vsel %vm788, %v781, %v785
    %v790 = vand.u32 2147483647, %v780
    %vm791 = vcmp.eq.f32.partialorder %v790, 8.507059e+37
    %v792 = vand.u32 %v780, 2147483648
    %v793 = vor.u32 1.1754944e-38, %v792
    %v794 = vsel %vm791, %v793, %v789
    %v795 = vmul.f32 1.0, %v794
    %v796 = vtanh.pop %v776
    %v797 = vmul.f32 %v795, %v662
    %799 = vrot.lane.b32.xlu0 %v796, 64
    %v800 = vpop.permute.xlu0 %799
    %v802 = vmul.f32 %v795, %v800
    %804 = vrot.lane.b32.xlu0 %v802, 32
    %v805 = vpop.permute.xlu0 %804
    %v807 = vadd.f32 %v797, %v805
    %v808 = vtanh.pop %v807
    %810 = vrot.lane.b32.xlu0 %v808, 64
    %v811 = vpop.permute.xlu0 %810
    %v813 = vmul.f32 %v795, %v811
    %815 = vrot.lane.b32.xlu0 %v813, 32
    %v816 = vpop.permute.xlu0 %815
    %v817 = vsel %vm172, %v816, 0
    %819 = vmatpush.msra.mxu0 0.0
    %820 = vmatpush.msra.mxu0 0.0
    %821 = vmatpush.msra.mxu0 0.0
    %822 = vmatpush.msra.mxu0 0.0
    %823 = vmatpush.msra.mxu0 0.0
    %824 = vmatpush.msra.mxu0 0.0
    %825 = vmatpush.msra.mxu0 0.0
    %826 = vmatpush.msra.mxu0 0.0
    %827 = vmatpush.msra.mxu0 0.0
    %828 = vmatpush.msra.mxu0 0.0
    %829 = vmatpush.msra.mxu0 0.0
    %830 = vmatpush.msra.mxu0 0.0
    %831 = vmatpush.msra.mxu0 %v132
    %832 = vmatpush.msra.mxu0 %v131
    %833 = vmatpush.msra.mxu0 %v130
    %834 = vmatpush.msra.mxu0 %v129
    %835 = vmatmul.f32.gmra.mxu0 %v817
    %v836 = vpop.f32.mrf.mxu0
    %v837 = vadd.f32 %v754, %v836
    %838 = vdwg.mxu0
    %v839 = vxor.u32 %v837, 2147483648
    %v840 = vmul.f32 %v839, 1.442695
    %v841 = vpow.pop %v840
    %v842 = vadd.f32 %v841, 1.0
    %v843 = vrcp.pop %v842
    %v844 = vmul.f32 %v842, %v843
    %v845 = vsub.f32 1.0, %v844
    %v846 = vmul.f32 %v843, %v845
    %v847 = vadd.f32 %v843, %v846
    %vm848 = vweird.f32 %v842
    %vm849 = vweird.f32 %v843
    %vm850 = vmor %vm848, %vm849
    %v851 = vsel %vm850, %v843, %v847
    %v852 = vand.u32 2147483647, %v842
    %vm853 = vcmp.eq.f32.partialorder %v852, 8.507059e+37
    %v854 = vand.u32 %v842, 2147483648
    %v855 = vor.u32 1.1754944e-38, %v854
    %v856 = vsel %vm853, %v855, %v851
    %v857 = vmul.f32 1.0, %v856
    %v858 = vtanh.pop %v837
    %v859 = vmul.f32 %v857, %v724
    %861 = vrot.lane.b32.xlu0 %v858, 64
    %v862 = vpop.permute.xlu0 %861
    %v864 = vmul.f32 %v857, %v862
    %866 = vrot.lane.b32.xlu0 %v864, 32
    %v867 = vpop.permute.xlu0 %866
    %v869 = vadd.f32 %v859, %v867
    %v870 = vtanh.pop %v869
    %872 = vrot.lane.b32.xlu0 %v870, 64
    %v873 = vpop.permute.xlu0 %872
    %v875 = vmul.f32 %v857, %v873
    %877 = vrot.lane.b32.xlu0 %v875, 32
    %v878 = vpop.permute.xlu0 %877
    %v879 = vsel %vm172, %v878, 0
    %881 = vmatpush.msra.mxu0 0.0
    %882 = vmatpush.msra.mxu0 0.0
    %883 = vmatpush.msra.mxu0 0.0
    %884 = vmatpush.msra.mxu0 0.0
    %885 = vmatpush.msra.mxu0 0.0
    %886 = vmatpush.msra.mxu0 0.0
    %887 = vmatpush.msra.mxu0 0.0
    %888 = vmatpush.msra.mxu0 0.0
    %889 = vmatpush.msra.mxu0 0.0
    %890 = vmatpush.msra.mxu0 0.0
    %891 = vmatpush.msra.mxu0 0.0
    %892 = vmatpush.msra.mxu0 0.0
    %893 = vmatpush.msra.mxu0 %v136
    %894 = vmatpush.msra.mxu0 %v135
    %895 = vmatpush.msra.mxu0 %v134
    %896 = vmatpush.msra.mxu0 %v133
    %897 = vmatmul.f32.gmra.mxu0 %v879
    %v898 = vpop.f32.mrf.mxu0
    %v899 = vadd.f32 %v170, %v898
    %900 = vdwg.mxu0
    %901 = vmatpush.msra.mxu0 0.0
    %902 = vmatpush.msra.mxu0 0.0
    %903 = vmatpush.msra.mxu0 0.0
    %904 = vmatpush.msra.mxu0 0.0
    %905 = vmatpush.msra.mxu0 0.0
    %906 = vmatpush.msra.mxu0 0.0
    %907 = vmatpush.msra.mxu0 0.0
    %908 = vmatpush.msra.mxu0 0.0
    %909 = vmatpush.msra.mxu0 0.0
    %910 = vmatpush.msra.mxu0 0.0
    %911 = vmatpush.msra.mxu0 0.0
    %912 = vmatpush.msra.mxu0 0.0
    %913 = vmatpush.msra.mxu0 %v128
    %914 = vmatpush.msra.mxu0 %v127
    %915 = vmatpush.msra.mxu0 %v126
    %916 = vmatpush.msra.mxu0 %v125
    %917 = vmatmul.f32.gmra.mxu0 %v817
    %v918 = vpop.f32.mrf.mxu0
    %v919 = vadd.f32 0.0, %v918
    %920 = vdwg.mxu0
    %v921 = vadd.f32 %v167, %v919
    %v922 = vxor.u32 %v921, 2147483648
    %v923 = vmul.f32 %v922, 1.442695
    %v924 = vpow.pop %v923
    %v925 = vadd.f32 %v924, 1.0
    %v926 = vrcp.pop %v925
    %v927 = vmul.f32 %v925, %v926
    %v928 = vsub.f32 1.0, %v927
    %v929 = vmul.f32 %v926, %v928
    %v930 = vadd.f32 %v926, %v929
    %vm931 = vweird.f32 %v925
    %vm932 = vweird.f32 %v926
    %vm933 = vmor %vm931, %vm932
    %v934 = vsel %vm933, %v926, %v930
    %v935 = vand.u32 2147483647, %v925
    %vm936 = vcmp.eq.f32.partialorder %v935, 8.507059e+37
    %v937 = vand.u32 %v925, 2147483648
    %v938 = vor.u32 1.1754944e-38, %v937
    %v939 = vsel %vm936, %v938, %v934
    %v940 = vmul.f32 1.0, %v939
    %v941 = vtanh.pop %v921
    %v942 = vmul.f32 %v940, %v807
    %944 = vrot.lane.b32.xlu0 %v941, 64
    %v945 = vpop.permute.xlu0 %944
    %v947 = vmul.f32 %v940, %v945
    %949 = vrot.lane.b32.xlu0 %v947, 32
    %v950 = vpop.permute.xlu0 %949
    %v952 = vadd.f32 %v942, %v950
    %v953 = vtanh.pop %v952
    %955 = vrot.lane.b32.xlu0 %v953, 64
    %v956 = vpop.permute.xlu0 %955
    %v958 = vmul.f32 %v940, %v956
    %960 = vrot.lane.b32.xlu0 %v958, 32
    %v961 = vpop.permute.xlu0 %960
    %v962 = vsel %vm172, %v961, 0
    %964 = vmatpush.msra.mxu0 0.0
    %965 = vmatpush.msra.mxu0 0.0
    %966 = vmatpush.msra.mxu0 0.0
    %967 = vmatpush.msra.mxu0 0.0
    %968 = vmatpush.msra.mxu0 0.0
    %969 = vmatpush.msra.mxu0 0.0
    %970 = vmatpush.msra.mxu0 0.0
    %971 = vmatpush.msra.mxu0 0.0
    %972 = vmatpush.msra.mxu0 0.0
    %973 = vmatpush.msra.mxu0 0.0
    %974 = vmatpush.msra.mxu0 0.0
    %975 = vmatpush.msra.mxu0 0.0
    %976 = vmatpush.msra.mxu0 %v132
    %977 = vmatpush.msra.mxu0 %v131
    %978 = vmatpush.msra.mxu0 %v130
    %979 = vmatpush.msra.mxu0 %v129
    %980 = vmatmul.f32.gmra.mxu0 %v962
    %v981 = vpop.f32.mrf.mxu0
    %v982 = vadd.f32 %v899, %v981
    %983 = vdwg.mxu0
    %v984 = vxor.u32 %v982, 2147483648
    %v985 = vmul.f32 %v984, 1.442695
    %v986 = vpow.pop %v985
    %v987 = vadd.f32 %v986, 1.0
    %v988 = vrcp.pop %v987
    %v989 = vmul.f32 %v987, %v988
    %v990 = vsub.f32 1.0, %v989
    %v991 = vmul.f32 %v988, %v990
    %v992 = vadd.f32 %v988, %v991
    %vm993 = vweird.f32 %v987
    %vm994 = vweird.f32 %v988
    %vm995 = vmor %vm993, %vm994
    %v996 = vsel %vm995, %v988, %v992
    %v997 = vand.u32 2147483647, %v987
    %vm998 = vcmp.eq.f32.partialorder %v997, 8.507059e+37
    %v999 = vand.u32 %v987, 2147483648
    %v1000 = vor.u32 1.1754944e-38, %v999
    %v1001 = vsel %vm998, %v1000, %v996
    %v1002 = vmul.f32 1.0, %v1001
    %v1003 = vtanh.pop %v982
    %v1004 = vmul.f32 %v1002, %v869
    %1006 = vrot.lane.b32.xlu0 %v1003, 64
    %v1007 = vpop.permute.xlu0 %1006
    %v1009 = vmul.f32 %v1002, %v1007
    %1011 = vrot.lane.b32.xlu0 %v1009, 32
    %v1012 = vpop.permute.xlu0 %1011
    %v1014 = vadd.f32 %v1004, %v1012
    %v1015 = vtanh.pop %v1014
    %1017 = vrot.lane.b32.xlu0 %v1015, 64
    %v1018 = vpop.permute.xlu0 %1017
    %v1020 = vmul.f32 %v1002, %v1018
    %1022 = vrot.lane.b32.xlu0 %v1020, 32
    %v1023 = vpop.permute.xlu0 %1022
    %v1024 = vsel %vm172, %v1023, 0
    %1026 = vmatpush.msra.mxu0 0.0
    %1027 = vmatpush.msra.mxu0 0.0
    %1028 = vmatpush.msra.mxu0 0.0
    %1029 = vmatpush.msra.mxu0 0.0
    %1030 = vmatpush.msra.mxu0 0.0
    %1031 = vmatpush.msra.mxu0 0.0
    %1032 = vmatpush.msra.mxu0 0.0
    %1033 = vmatpush.msra.mxu0 0.0
    %1034 = vmatpush.msra.mxu0 0.0
    %1035 = vmatpush.msra.mxu0 0.0
    %1036 = vmatpush.msra.mxu0 0.0
    %1037 = vmatpush.msra.mxu0 0.0
    %1038 = vmatpush.msra.mxu0 %v136
    %1039 = vmatpush.msra.mxu0 %v135
    %1040 = vmatpush.msra.mxu0 %v134
    %1041 = vmatpush.msra.mxu0 %v133
    %1042 = vmatmul.f32.gmra.mxu0 %v1024
    %v1043 = vpop.f32.mrf.mxu0
    %v1044 = vadd.f32 %v170, %v1043
    %1045 = vdwg.mxu0
    %1046 = vmatpush.msra.mxu0 0.0
    %1047 = vmatpush.msra.mxu0 0.0
    %1048 = vmatpush.msra.mxu0 0.0
    %1049 = vmatpush.msra.mxu0 0.0
    %1050 = vmatpush.msra.mxu0 0.0
    %1051 = vmatpush.msra.mxu0 0.0
    %1052 = vmatpush.msra.mxu0 0.0
    %1053 = vmatpush.msra.mxu0 0.0
    %1054 = vmatpush.msra.mxu0 0.0
    %1055 = vmatpush.msra.mxu0 0.0
    %1056 = vmatpush.msra.mxu0 0.0
    %1057 = vmatpush.msra.mxu0 0.0
    %1058 = vmatpush.msra.mxu0 %v128
    %1059 = vmatpush.msra.mxu0 %v127
    %1060 = vmatpush.msra.mxu0 %v126
    %1061 = vmatpush.msra.mxu0 %v125
    %1062 = vmatmul.f32.gmra.mxu0 %v962
    %v1063 = vpop.f32.mrf.mxu0
    %v1064 = vadd.f32 0.0, %v1063
    %1065 = vdwg.mxu0
    %v1066 = vadd.f32 %v167, %v1064
    %v1067 = vxor.u32 %v1066, 2147483648
    %v1068 = vmul.f32 %v1067, 1.442695
    %v1069 = vpow.pop %v1068
    %v1070 = vadd.f32 %v1069, 1.0
    %v1071 = vrcp.pop %v1070
    %v1072 = vmul.f32 %v1070, %v1071
    %v1073 = vsub.f32 1.0, %v1072
    %v1074 = vmul.f32 %v1071, %v1073
    %v1075 = vadd.f32 %v1071, %v1074
    %vm1076 = vweird.f32 %v1070
    %vm1077 = vweird.f32 %v1071
    %vm1078 = vmor %vm1076, %vm1077
    %v1079 = vsel %vm1078, %v1071, %v1075
    %v1080 = vand.u32 2147483647, %v1070
    %vm1081 = vcmp.eq.f32.partialorder %v1080, 8.507059e+37
    %v1082 = vand.u32 %v1070, 2147483648
    %v1083 = vor.u32 1.1754944e-38, %v1082
    %v1084 = vsel %vm1081, %v1083, %v1079
    %v1085 = vmul.f32 1.0, %v1084
    %v1086 = vtanh.pop %v1066
    %v1087 = vmul.f32 %v1085, %v952
    %1089 = vrot.lane.b32.xlu0 %v1086, 64
    %v1090 = vpop.permute.xlu0 %1089
    %v1092 = vmul.f32 %v1085, %v1090
    %1094 = vrot.lane.b32.xlu0 %v1092, 32
    %v1095 = vpop.permute.xlu0 %1094
    %v1097 = vadd.f32 %v1087, %v1095
    %v1098 = vtanh.pop %v1097
    %1100 = vrot.lane.b32.xlu0 %v1098, 64
    %v1101 = vpop.permute.xlu0 %1100
    %v1103 = vmul.f32 %v1085, %v1101
    %1105 = vrot.lane.b32.xlu0 %v1103, 32
    %v1106 = vpop.permute.xlu0 %1105
    %v1107 = vsel %vm172, %v1106, 0
    %1109 = vmatpush.msra.mxu0 0.0
    %1110 = vmatpush.msra.mxu0 0.0
    %1111 = vmatpush.msra.mxu0 0.0
    %1112 = vmatpush.msra.mxu0 0.0
    %1113 = vmatpush.msra.mxu0 0.0
    %1114 = vmatpush.msra.mxu0 0.0
    %1115 = vmatpush.msra.mxu0 0.0
    %1116 = vmatpush.msra.mxu0 0.0
    %1117 = vmatpush.msra.mxu0 0.0
    %1118 = vmatpush.msra.mxu0 0.0
    %1119 = vmatpush.msra.mxu0 0.0
    %1120 = vmatpush.msra.mxu0 0.0
    %1121 = vmatpush.msra.mxu0 %v132
    %1122 = vmatpush.msra.mxu0 %v131
    %1123 = vmatpush.msra.mxu0 %v130
    %1124 = vmatpush.msra.mxu0 %v129
    %1125 = vmatmul.f32.gmra.mxu0 %v1107
    %v1126 = vpop.f32.mrf.mxu0
    %v1127 = vadd.f32 %v1044, %v1126
    %1128 = vdwg.mxu0
    %v1129 = vxor.u32 %v1127, 2147483648
    %v1130 = vmul.f32 %v1129, 1.442695
    %v1131 = vpow.pop %v1130
    %v1132 = vadd.f32 %v1131, 1.0
    %v1133 = vrcp.pop %v1132
    %v1134 = vmul.f32 %v1132, %v1133
    %v1135 = vsub.f32 1.0, %v1134
    %v1136 = vmul.f32 %v1133, %v1135
    %v1137 = vadd.f32 %v1133, %v1136
    %vm1138 = vweird.f32 %v1132
    %vm1139 = vweird.f32 %v1133
    %vm1140 = vmor %vm1138, %vm1139
    %v1141 = vsel %vm1140, %v1133, %v1137
    %v1142 = vand.u32 2147483647, %v1132
    %vm1143 = vcmp.eq.f32.partialorder %v1142, 8.507059e+37
    %v1144 = vand.u32 %v1132, 2147483648
    %v1145 = vor.u32 1.1754944e-38, %v1144
    %v1146 = vsel %vm1143, %v1145, %v1141
    %v1147 = vmul.f32 1.0, %v1146
    %v1148 = vtanh.pop %v1127
    %v1149 = vmul.f32 %v1147, %v1014
    %1151 = vrot.lane.b32.xlu0 %v1148, 64
    %v1152 = vpop.permute.xlu0 %1151
    %v1154 = vmul.f32 %v1147, %v1152
    %1156 = vrot.lane.b32.xlu0 %v1154, 32
    %v1157 = vpop.permute.xlu0 %1156
    %v1159 = vadd.f32 %v1149, %v1157
    %v1160 = vtanh.pop %v1159
    %1162 = vrot.lane.b32.xlu0 %v1160, 64
    %v1163 = vpop.permute.xlu0 %1162
    %v1165 = vmul.f32 %v1147, %v1163
    %1167 = vrot.lane.b32.xlu0 %v1165, 32
    %v1168 = vpop.permute.xlu0 %1167
    %v1169 = vsel %vm172, %v1168, 0
    %1171 = vmatpush.msra.mxu0 0.0
    %1172 = vmatpush.msra.mxu0 0.0
    %1173 = vmatpush.msra.mxu0 0.0
    %1174 = vmatpush.msra.mxu0 0.0
    %1175 = vmatpush.msra.mxu0 0.0
    %1176 = vmatpush.msra.mxu0 0.0
    %1177 = vmatpush.msra.mxu0 0.0
    %1178 = vmatpush.msra.mxu0 0.0
    %1179 = vmatpush.msra.mxu0 0.0
    %1180 = vmatpush.msra.mxu0 0.0
    %1181 = vmatpush.msra.mxu0 0.0
    %1182 = vmatpush.msra.mxu0 0.0
    %1183 = vmatpush.msra.mxu0 %v136
    %1184 = vmatpush.msra.mxu0 %v135
    %1185 = vmatpush.msra.mxu0 %v134
    %1186 = vmatpush.msra.mxu0 %v133
    %1187 = vmatmul.f32.gmra.mxu0 %v1169
    %v1188 = vpop.f32.mrf.mxu0
    %v1189 = vadd.f32 %v170, %v1188
    %1190 = vdwg.mxu0
    %1191 = vmatpush.msra.mxu0 0.0
    %1192 = vmatpush.msra.mxu0 0.0
    %1193 = vmatpush.msra.mxu0 0.0
    %1194 = vmatpush.msra.mxu0 0.0
    %1195 = vmatpush.msra.mxu0 0.0
    %1196 = vmatpush.msra.mxu0 0.0
    %1197 = vmatpush.msra.mxu0 0.0
    %1198 = vmatpush.msra.mxu0 0.0
    %1199 = vmatpush.msra.mxu0 0.0
    %1200 = vmatpush.msra.mxu0 0.0
    %1201 = vmatpush.msra.mxu0 0.0
    %1202 = vmatpush.msra.mxu0 0.0
    %1203 = vmatpush.msra.mxu0 %v128
    %1204 = vmatpush.msra.mxu0 %v127
    %1205 = vmatpush.msra.mxu0 %v126
    %1206 = vmatpush.msra.mxu0 %v125
    %1207 = vmatmul.f32.gmra.mxu0 %v1107
    %v1208 = vpop.f32.mrf.mxu0
    %v1209 = vadd.f32 0.0, %v1208
    %1210 = vdwg.mxu0
    %v1211 = vadd.f32 %v167, %v1209
    %v1212 = vxor.u32 %v1211, 2147483648
    %v1213 = vmul.f32 %v1212, 1.442695
    %v1214 = vpow.pop %v1213
    %v1215 = vadd.f32 %v1214, 1.0
    %v1216 = vrcp.pop %v1215
    %v1217 = vmul.f32 %v1215, %v1216
    %v1218 = vsub.f32 1.0, %v1217
    %v1219 = vmul.f32 %v1216, %v1218
    %v1220 = vadd.f32 %v1216, %v1219
    %vm1221 = vweird.f32 %v1215
    %vm1222 = vweird.f32 %v1216
    %vm1223 = vmor %vm1221, %vm1222
    %v1224 = vsel %vm1223, %v1216, %v1220
    %v1225 = vand.u32 2147483647, %v1215
    %vm1226 = vcmp.eq.f32.partialorder %v1225, 8.507059e+37
    %v1227 = vand.u32 %v1215, 2147483648
    %v1228 = vor.u32 1.1754944e-38, %v1227
    %v1229 = vsel %vm1226, %v1228, %v1224
    %v1230 = vmul.f32 1.0, %v1229
    %v1231 = vtanh.pop %v1211
    %v1232 = vmul.f32 %v1230, %v1097
    %1234 = vrot.lane.b32.xlu0 %v1231, 64
    %v1235 = vpop.permute.xlu0 %1234
    %v1237 = vmul.f32 %v1230, %v1235
    %1239 = vrot.lane.b32.xlu0 %v1237, 32
    %v1240 = vpop.permute.xlu0 %1239
    %v1242 = vadd.f32 %v1232, %v1240
    %v1243 = vtanh.pop %v1242
    %1245 = vrot.lane.b32.xlu0 %v1243, 64
    %v1246 = vpop.permute.xlu0 %1245
    %v1248 = vmul.f32 %v1230, %v1246
    %1250 = vrot.lane.b32.xlu0 %v1248, 32
    %v1251 = vpop.permute.xlu0 %1250
    %v1252 = vsel %vm172, %v1251, 0
    %1254 = vmatpush.msra.mxu0 0.0
    %1255 = vmatpush.msra.mxu0 0.0
    %1256 = vmatpush.msra.mxu0 0.0
    %1257 = vmatpush.msra.mxu0 0.0
    %1258 = vmatpush.msra.mxu0 0.0
    %1259 = vmatpush.msra.mxu0 0.0
    %1260 = vmatpush.msra.mxu0 0.0
    %1261 = vmatpush.msra.mxu0 0.0
    %1262 = vmatpush.msra.mxu0 0.0
    %1263 = vmatpush.msra.mxu0 0.0
    %1264 = vmatpush.msra.mxu0 0.0
    %1265 = vmatpush.msra.mxu0 0.0
    %1266 = vmatpush.msra.mxu0 %v132
    %1267 = vmatpush.msra.mxu0 %v131
    %1268 = vmatpush.msra.mxu0 %v130
    %1269 = vmatpush.msra.mxu0 %v129
    %1270 = vmatmul.f32.gmra.mxu0 %v1252
    %v1271 = vpop.f32.mrf.mxu0
    %v1272 = vadd.f32 %v1189, %v1271
    %1273 = vdwg.mxu0
    %v1274 = vxor.u32 %v1272, 2147483648
    %v1275 = vmul.f32 %v1274, 1.442695
    %v1276 = vpow.pop %v1275
    %v1277 = vadd.f32 %v1276, 1.0
    %v1278 = vrcp.pop %v1277
    %v1279 = vmul.f32 %v1277, %v1278
    %v1280 = vsub.f32 1.0, %v1279
    %v1281 = vmul.f32 %v1278, %v1280
    %v1282 = vadd.f32 %v1278, %v1281
    %vm1283 = vweird.f32 %v1277
    %vm1284 = vweird.f32 %v1278
    %vm1285 = vmor %vm1283, %vm1284
    %v1286 = vsel %vm1285, %v1278, %v1282
    %v1287 = vand.u32 2147483647, %v1277
    %vm1288 = vcmp.eq.f32.partialorder %v1287, 8.507059e+37
    %v1289 = vand.u32 %v1277, 2147483648
    %v1290 = vor.u32 1.1754944e-38, %v1289
    %v1291 = vsel %vm1288, %v1290, %v1286
    %v1292 = vmul.f32 1.0, %v1291
    %v1293 = vtanh.pop %v1272
    %v1294 = vmul.f32 %v1292, %v1159
    %1296 = vrot.lane.b32.xlu0 %v1293, 64
    %v1297 = vpop.permute.xlu0 %1296
    %v1299 = vmul.f32 %v1292, %v1297
    %1301 = vrot.lane.b32.xlu0 %v1299, 32
    %v1302 = vpop.permute.xlu0 %1301
    %v1304 = vadd.f32 %v1294, %v1302
    %v1305 = vtanh.pop %v1304
    %1307 = vrot.lane.b32.xlu0 %v1305, 64
    %v1308 = vpop.permute.xlu0 %1307
    %v1310 = vmul.f32 %v1292, %v1308
    %1312 = vrot.lane.b32.xlu0 %v440, 64
    %v1313 = vpop.permute.xlu0 %1312
    %1315 = vrot.lane.b32.xlu0 %v585, 96
    %v1316 = vpop.permute.xlu0 %1315
    %1319 = vrot.lane.b32.xlu0 %v1020, 64
    %v1320 = vpop.permute.xlu0 %1319
    %1322 = vrot.lane.b32.xlu0 %v1165, 96
    %v1323 = vpop.permute.xlu0 %1322
    %v1325 = vsel %vm172, %v298, %v1313
    %vm1326 = vcmask 523264
    %v1327 = vsel %vm1326, %v1325, %v1316
    %vm1328 = vcmask 785408
    %v1329 = vsel %vm1328, %v1327, %v730
    %v1330 = vsel %vm172, %v878, %v1320
    %v1331 = vsel %vm1326, %v1330, %v1323
    %v1332 = vsel %vm1328, %v1331, %v1310
    %v1333 = vld [vmem:[#allocation11] sm:$0xff]
    %v1334 = vld [vmem:[#allocation11 + $0x8] sm:$0xff]
    %v1335 = vld [vmem:[#allocation11 + $0x10] sm:$0xff]
    %v1336 = vld [vmem:[#allocation11 + $0x18] sm:$0xff]
    %v1337 = vld [vmem:[#allocation11 + $0x20] sm:$0xff]
    %v1338 = vld [vmem:[#allocation11 + $0x28] sm:$0xff]
    %v1339 = vld [vmem:[#allocation11 + $0x30] sm:$0xff]
    %v1340 = vld [vmem:[#allocation11 + $0x38] sm:$0xff]
    %v1341 = vld [vmem:[#allocation11 + $0x40] sm:$0xff]
    %v1342 = vld [vmem:[#allocation11 + $0x48] sm:$0xff]
    %v1343 = vld [vmem:[#allocation11 + $0x50] sm:$0xff]
    %v1344 = vld [vmem:[#allocation11 + $0x58] sm:$0xff]
    %v1345 = vld [vmem:[#allocation11 + $0x60] sm:$0xff]
    %v1346 = vld [vmem:[#allocation11 + $0x68] sm:$0xff]
    %v1347 = vld [vmem:[#allocation11 + $0x70] sm:$0xff]
    %v1348 = vld [vmem:[#allocation11 + $0x78] sm:$0xff]
    %v1349 = vld [vmem:[#allocation11 + $0x80] sm:$0xff]
    %v1350 = vld [vmem:[#allocation11 + $0x88] sm:$0xff]
    %v1351 = vld [vmem:[#allocation11 + $0x90] sm:$0xff]
    %v1352 = vld [vmem:[#allocation11 + $0x98] sm:$0xff]
    %v1353 = vld [vmem:[#allocation11 + $0xa0] sm:$0xff]
    %v1354 = vld [vmem:[#allocation11 + $0xa8] sm:$0xff]
    %v1355 = vld [vmem:[#allocation11 + $0xb0] sm:$0xff]
    %v1356 = vld [vmem:[#allocation11 + $0xb8] sm:$0xff]
    %v1357 = vld [vmem:[#allocation11 + $0xc0] sm:$0xff]
    %v1358 = vld [vmem:[#allocation11 + $0xc8] sm:$0xff]
    %v1359 = vld [vmem:[#allocation11 + $0xd0] sm:$0xff]
    %v1360 = vld [vmem:[#allocation11 + $0xd8] sm:$0xff]
    %v1361 = vld [vmem:[#allocation11 + $0xe0] sm:$0xff]
    %v1362 = vld [vmem:[#allocation11 + $0xe8] sm:$0xff]
    %v1363 = vld [vmem:[#allocation11 + $0xf0] sm:$0xff]
    %v1364 = vld [vmem:[#allocation11 + $0xf8] sm:$0xff]
    %v1365 = vld [vmem:[%s8] sm:$0x1]
    %v1367 = vperm.slane %v1365, 0
    %1369 = vmatpush.msra.mxu0 %v1348
    %1370 = vmatpush.msra.mxu0 %v1347
    %1371 = vmatpush.msra.mxu0 %v1346
    %1372 = vmatpush.msra.mxu0 %v1345
    %1373 = vmatpush.msra.mxu0 %v1344
    %1374 = vmatpush.msra.mxu0 %v1343
    %1375 = vmatpush.msra.mxu0 %v1342
    %1376 = vmatpush.msra.mxu0 %v1341
    %1377 = vmatpush.msra.mxu0 %v1340
    %1378 = vmatpush.msra.mxu0 %v1339
    %1379 = vmatpush.msra.mxu0 %v1338
    %1380 = vmatpush.msra.mxu0 %v1337
    %1381 = vmatpush.msra.mxu0 %v1336
    %1382 = vmatpush.msra.mxu0 %v1335
    %1383 = vmatpush.msra.mxu0 %v1334
    %1384 = vmatpush.msra.mxu0 %v1333
    %1385 = vmatmul.f32.gmra.mxu0 %v1329
    %v1386 = vpop.f32.mrf.mxu0
    %v1387 = vadd.f32 %v1367, %v1386
    %1388 = vdwg.mxu0
    %1389 = vmatpush.msra.mxu0 %v1364
    %1390 = vmatpush.msra.mxu0 %v1363
    %1391 = vmatpush.msra.mxu0 %v1362
    %1392 = vmatpush.msra.mxu0 %v1361
    %1393 = vmatpush.msra.mxu0 %v1360
    %1394 = vmatpush.msra.mxu0 %v1359
    %1395 = vmatpush.msra.mxu0 %v1358
    %1396 = vmatpush.msra.mxu0 %v1357
    %1397 = vmatpush.msra.mxu0 %v1356
    %1398 = vmatpush.msra.mxu0 %v1355
    %1399 = vmatpush.msra.mxu0 %v1354
    %1400 = vmatpush.msra.mxu0 %v1353
    %1401 = vmatpush.msra.mxu0 %v1352
    %1402 = vmatpush.msra.mxu0 %v1351
    %1403 = vmatpush.msra.mxu0 %v1350
    %1404 = vmatpush.msra.mxu0 %v1349
    %1405 = vmatmul.f32.gmra.mxu0 %v1332
    %v1406 = vpop.f32.mrf.mxu0
    %v1407 = vadd.f32 %v1387, %v1406
    %1408 = vdwg.mxu0
    %1409 = vst [vmem:[#allocation13] sm:$0xf] %v1407
    // Predicated region
    $region62: #{tpu_custom_call.1} parent=1 // pred_check
      _
    $region63: #{tpu_custom_call.1} parent=1 // pred_check_branch
      %1411 = sbr.rel (0) target = $region65
    $region64: #{tpu_custom_call.1} parent=1 // pred_region
      %1413 = vsyncadd [#allocation4], 0
      %s1415 = sshll.u32 [#allocation13], 4
      %s1416 = int_to_ptr.vmem [resolvable:$true] %s1415
      %s1417 = sshll.u32 %s9, 4
      %s1418 = int_to_ptr.hbm [resolvable:$true] %s1417
      %1420 = dma.vmem_to_hbm [thread:$0]  %s1416, 64, %s1418, [#allocation4]
    $region65: #{tpu_custom_call.1} parent=1 // pred_fallthru
      _
    // Predicated region
    $region66: #{tpu_custom_call.1} parent=1 // pred_check
      _
    $region67: #{tpu_custom_call.1} parent=1 // pred_check_branch
      %1422 = sbr.rel (0) target = $region69
    $region68: #{tpu_custom_call.1} parent=1 // pred_region
      %1424 = dma.done [#allocation4], 64
    $region69: #{tpu_custom_call.1} parent=1 // pred_fallthru
      _
    %1425 = vsyncpa [#allocation3], 1
    %1426 = vsyncpa [#allocation6], 1
    %1427 = vsyncpa [#allocation9], 1
    %1428 = vsyncpa [#allocation12], 1
    %1429 = vsyncpa [#allocation4], 1

</llo_original>
